<compile_context>
chip_gen: v7x
topology: tpu7x:2x2x1
jax: 0.10.0
libtpu: 0.0.40
codegen_flags: <defaults>
</compile_context>

<pallas_src>
import jax
import jax.numpy as jnp
import numpy as np
from jax.experimental import pallas as pl
from jax.experimental.pallas import tpu as pltpu

FEATURE_DIM = 64                         # D
HALF = FEATURE_DIM // 2                  # 32 (mid dim of D->D/2->D MLPs)
MID_LOCAL = max(32, FEATURE_DIM // 4)    # 32 (local_cnn hidden)
SCALES = (1.0, 2.0, 4.0)
assert MID_LOCAL == HALF                 # packing below relies on this for D=64

# ----- packed-parameter stack indices (must match pack_params ordering) -----
W3_LP2, W3_IG, W3_CF = 0, 1, 2                      # w64128 stack (3,64,128)
W2_TS1, W2_SC1 = 0, 1                               # w6496 stack  (2,64,96)
W4_IMP2, W4_COND2, W4_GATEC, W4_FUSEM = 0, 1, 2, 3  # w64 stack    (4,64,64)
W32_ENH1, W32_SA2 = 0, 1                            # w6432 stack  (2,64,32)
B128_LP2, B128_TS2, B128_IG, B128_CF = 0, 1, 2, 3   # b128         (4,128)
B96_TS1, B96_SC1 = 0, 1                             # b96          (2,96)
B64_PTS, B64_IMP2, B64_COND2, B64_SA1, B64_ENH2 = 0, 1, 2, 3, 4   # b64 (5,64)
B192_ST2, B192_INV = 0, 1                           # b192         (2,192)
B32_ENH1, B32_SA2 = 0, 1                            # b32          (2,32)

PACK_ORDER = ("w_pts", "w64128", "w6496", "w_ts2", "w_st2", "w64", "w_sa1",
              "w6432", "w_enh2", "b128", "b96", "b64", "b192", "b32")


def _round_up(x, m):
    return (x + m - 1) // m * m


# ---------------------------------------------------------------------------
# Synthetic parameters mirroring the PyTorch module structure.
# Each Linear / Conv1d(k=1) is stored as W:(in,out), b:(out,) so y = x @ W + b
# (PyTorch weight is W.T).
# ---------------------------------------------------------------------------
def init_raw_params(key, d=FEATURE_DIM):
    h = d // 2
    layers = [
        ("local1", 3, MID_LOCAL), ("local2", MID_LOCAL, d),
        ("temp1", d, d), ("temp2", d, d),
        ("spat1", d, h), ("spat2", h, d),
        ("pos1", 3, h), ("pos2", h, d),
        ("imp1", d, d), ("imp2", d, d),
        ("cond1", d, d), ("cond2", d, d),
        ("gate", 2 * d, d),
        ("st1_0", d, h), ("st2_0", h, d),
        ("st1_1", d, h), ("st2_1", h, d),
        ("st1_2", d, h), ("st2_2", h, d),
        ("sa1", 3 * d, d), ("sa2", d, len(SCALES)),
        ("enh1", d, h), ("enh2", h, d),
        ("fuse", 2 * d, d),
    ]
    raw = {}
    keys = jax.random.split(key, len(layers))
    for k, (name, fi, fo) in zip(keys, layers):
        kw, kb = jax.random.split(k)
        raw[name + "_w"] = 0.1 * jax.random.normal(kw, (fi, fo), jnp.float32)
        raw[name + "_b"] = 0.1 * jax.random.normal(kb, (fo,), jnp.float32)
    return raw


def _blockdiag(a, b):
    """[[a, 0], [0, b]] for 2-D f32 arrays."""
    z_top = jnp.zeros((a.shape[0], b.shape[1]), jnp.float32)
    z_bot = jnp.zeros((b.shape[0], a.shape[1]), jnp.float32)
    return jnp.concatenate(
        [jnp.concatenate([a, z_top], axis=1),
         jnp.concatenate([z_bot, b], axis=1)], axis=0)


def pack_params(raw, d=FEATURE_DIM):
    """Pack raw per-layer params into a few stacked/fused tensors."""
    h = d // 2
    bf16 = jnp.bfloat16
    W = lambda n: raw[n + "_w"]
    B = lambda n: raw[n + "_b"]

    # K=3 layers fused on the lane axis, kept f32 (VPU FMA path).
    w_pts = jnp.concatenate([W("local1"), W("pos1")], axis=1)             # (3,64)
    b_pts = jnp.concatenate([B("local1"), B("pos1")], axis=0)             # (64,)

    gate_w = W("gate")                      # (2d,d): rows = [features, cond]
    gw_f, gw_c = gate_w[:d], gate_w[d:]
    fuse_w = W("fuse")                      # (2d,d): rows = [multi, spatial]
    fw_m, fw_s = fuse_w[:d], fuse_w[d:]

    w64128 = jnp.stack([
        _blockdiag(W("local2"), W("pos2")),                # local2 | pos2 block-diag
        jnp.concatenate([W("imp1"), gw_f], axis=1),        # imp1 | gate(features)
        jnp.concatenate([W("cond1"), fw_s], axis=1),       # cond1 | fuse(spatial)
    ]).astype(bf16)                                                        # (3,64,128)

    w6496 = jnp.stack([
        jnp.concatenate([W("temp1"), W("spat1")], axis=1),                 # temp1|spat1
        jnp.concatenate([W("st1_0"), W("st1_1"), W("st1_2")], axis=1),     # 3 scale L1s
    ]).astype(bf16)                                                        # (2,64,96)

    w_ts2 = _blockdiag(W("temp2"), W("spat2")).astype(bf16)                # (96,128)
    w_st2 = _blockdiag(_blockdiag(W("st2_0"), W("st2_1")),
                       W("st2_2")).astype(bf16)                            # (96,192)

    w64 = jnp.stack([W("imp2"), W("cond2"), gw_c, fw_m]).astype(bf16)      # (4,64,64)
    w_sa1 = W("sa1").astype(bf16)                                          # (192,64)
    w6432 = jnp.stack([
        W("enh1"),
        jnp.pad(W("sa2"), ((0, 0), (0, h - len(SCALES)))),                 # 3 -> 32 cols
    ]).astype(bf16)                                                        # (2,64,32)
    w_enh2 = W("enh2").astype(bf16)                                        # (32,64)

    b128 = jnp.stack([
        jnp.concatenate([B("local2"), B("pos2")]),
        jnp.concatenate([B("temp2"), B("spat2")]),
        jnp.concatenate([B("imp1"), B("gate")]),
        jnp.concatenate([B("cond1"), B("fuse")]),
    ])                                                                     # (4,128)
    b96 = jnp.stack([
        jnp.concatenate([B("temp1"), B("spat1")]),
        jnp.concatenate([B("st1_0"), B("st1_1"), B("st1_2")]),
    ])                                                                     # (2,96)
    b64 = jnp.stack([b_pts, B("imp2"), B("cond2"), B("sa1"), B("enh2")])   # (5,64)
    inv_row = jnp.repeat(jnp.array([1.0 / s for s in SCALES], jnp.float32), d)
    b192 = jnp.stack([
        jnp.concatenate([B("st2_0"), B("st2_1"), B("st2_2")]),
        inv_row,                                                           # 1/scale row
    ])                                                                     # (2,192)
    b32 = jnp.stack([B("enh1"),
                     jnp.pad(B("sa2"), (0, h - len(SCALES)))])             # (2,32)

    return {"w_pts": w_pts, "w64128": w64128, "w6496": w6496, "w_ts2": w_ts2,
            "w_st2": w_st2, "w64": w64, "w_sa1": w_sa1, "w6432": w6432,
            "w_enh2": w_enh2, "b128": b128, "b96": b96, "b64": b64,
            "b192": b192, "b32": b32}


# ---------------------------------------------------------------------------
# Fused Pallas kernel: one row-tile of points -> one row-tile of features.
# ---------------------------------------------------------------------------
def hybrid_kernel(pts_ref, wpts_ref, w64128_ref, w6496_ref, wts2_ref, wst2_ref,
                  w64_ref, wsa1_ref, w6432_ref, wenh2_ref,
                  b128_ref, b96_ref, b64_ref, b192_ref, b32_ref, out_ref):
    D, NS = FEATURE_DIM, len(SCALES)
    relu = lambda v: jnp.maximum(v, 0.0)
    sigmoid = jax.nn.sigmoid

    def mm(x, w):                                        # bf16 MXU, f32 accum
        return jnp.dot(x.astype(jnp.bfloat16), w,
                       preferred_element_type=jnp.float32)

    b128 = lambda i: b128_ref[i:i + 1, :]
    b96 = lambda i: b96_ref[i:i + 1, :]
    b64 = lambda i: b64_ref[i:i + 1, :]
    b32 = lambda i: b32_ref[i:i + 1, :]

    pts = pts_ref[...]                                   # (tm, 3) f32
    wpts = wpts_ref[...]                                 # (3, 64) f32

    # local_cnn L1 + position_encoding L1 (K=3 -> three VPU FMAs, fused N=64)
    h_pts = relu(pts[:, 0:1] * wpts[0:1, :]
                 + pts[:, 1:2] * wpts[1:2, :]
                 + pts[:, 2:3] * wpts[2:3, :]
                 + b64(B64_PTS))                         # (tm, 64)

    # local_cnn L2 + position_encoding L2: one block-diagonal (64,128) matmul
    lp = mm(h_pts, w64128_ref[W3_LP2]) + b128(B128_LP2)  # (tm, 128)
    local, pos_enc = lp[:, :D], lp[:, D:]

    # temporal L1 + spatial L1 fused on N (96); their L2s block-diagonal (96,128)
    ts = relu(mm(local, w6496_ref[W2_TS1]) + b96(B96_TS1))        # (tm, 96)
    tsp = mm(ts, wts2_ref[...]) + b128(B128_TS2)                  # (tm, 128)
    temporal, spatial_w = tsp[:, :D], tsp[:, D:]
    spatial = local + spatial_w * pos_enc

    # dynamic adapter:
    #   importance L1 + gate(features half) fused (LHS = temporal)
    #   cond1 + fuse(spatial half) fused        (LHS = spatial); cf[:,64:]
    #   already includes b_fuse and is held for the final fusion add.
    ig = mm(temporal, w64128_ref[W3_IG]) + b128(B128_IG)          # (tm, 128)
    cf = mm(spatial, w64128_ref[W3_CF]) + b128(B128_CF)           # (tm, 128)
    importance = sigmoid(mm(relu(ig[:, :D]), w64_ref[W4_IMP2]) + b64(B64_IMP2))
    condition = mm(relu(cf[:, :D]), w64_ref[W4_COND2]) + b64(B64_COND2)
    gate = sigmoid(ig[:, D:] + mm(condition, w64_ref[W4_GATEC]))
    adapted = temporal * importance * gate + condition * (1.0 - gate)

    # multi-scale: 3 scale L1s fused on N (96); 3 scale L2s block-diag (96,192)
    psum = jnp.sum(pts, axis=-1, keepdims=True)                   # (tm, 1)
    sc1 = relu(mm(adapted, w6496_ref[W2_SC1]) + b96(B96_SC1))     # (tm, 96)
    slab = mm(sc1, wst2_ref[...]) + b192_ref[B192_ST2:B192_ST2 + 1, :]  # (tm,192)
    # per-scale (1 + tanh(psum/scale)) applied to 64-lane slices via a (1,192)
    # inverse-scale row (EUP tanh has slack)
    slab = slab * (1.0 + jnp.tanh(psum * b192_ref[B192_INV:B192_INV + 1, :]))

    # scale attention: slab == cat(sf0, sf1, sf2); single K=192 sa1 matmul
    hidden = relu(mm(slab, wsa1_ref[...]) + b64(B64_SA1))
    logits = (mm(hidden, w6432_ref[W32_SA2]) + b32(B32_SA2))[:, :NS]
    mlog = jnp.max(logits, axis=-1, keepdims=True)
    e = jnp.exp(logits - mlog)
    attw = e * pl.reciprocal(jnp.sum(e, axis=-1, keepdims=True), approx=True)
    weighted = (slab[:, :D] * attw[:, 0:1] + slab[:, D:2 * D] * attw[:, 1:2]
                + slab[:, 2 * D:] * attw[:, 2:3])

    enhanced = (mm(relu(mm(weighted, w6432_ref[W32_ENH1]) + b32(B32_ENH1)),
                   wenh2_ref[...]) + b64(B64_ENH2))
    multi = enhanced + adapted

    # fusion: multi @ W_fuse_m + (spatial @ W_fuse_s + b_fuse)  [cf partial]
    out_ref[...] = relu(mm(multi, w64_ref[W4_FUSEM]) + cf[:, D:])


# ---------------------------------------------------------------------------
# Wrapper with chip-aware tiling defaults.
# ---------------------------------------------------------------------------
def _chip_defaults():
    """Returns (tensorcores_per_device, default_tm, default_vmem_limit)."""
    try:
        kind = jax.devices()[0].device_kind.lower()
    except Exception:
        kind = ""
    two_core = ("7" in kind) or ("v4" in kind) or ("v5p" in kind)
    if two_core:
        # v7x: 2 TensorCores, only 64 MiB physical VMEM -> moderate tile,
        # conservative scoped-VMEM limit, target >= 2 grid steps per core.
        return 2, 1024, 48 * 1024 * 1024
    # v5e / v6e: 1 TensorCore, 128 MiB VMEM -> one big tile, no forced split.
    return 1, 2048, 80 * 1024 * 1024


def hybrid_feature_extractor(points, time, packed, *, tm=None,
                             vmem_limit_bytes=None):
    """points: (B,N,3) or (N,3); time accepted for parity (unused by forward)."""
    del time  # time_embedding is never used in the PyTorch forward
    if points.ndim == 2:
        points = points[None]
    b, n, _ = points.shape
    m = b * n
    pts = points.reshape(m, 3).astype(jnp.float32)

    cores, tm_default, vmem_default = _chip_defaults()
    tm = tm_default if tm is None else _round_up(max(int(tm), 8), 8)
    if vmem_limit_bytes is None:
        vmem_limit_bytes = vmem_default

    m8 = _round_up(m, 8)
    if cores > 1:
        # Aim for >= 2 grid steps per TensorCore when M allows (keeps intra-core
        # input/output double-buffering alive on the 2-TC parts).
        tm_cap = _round_up(pl.cdiv(m, 2 * cores), 8)
        tm_eff = max(8, min(tm, tm_cap, m8))
    else:
        # Single-TC chips: splitting only adds per-step overhead.
        tm_eff = max(8, min(tm, m8))

    m_pad = _round_up(m, tm_eff)
    if m_pad != m:                                   # pad rows; results sliced off
        pts = jnp.pad(pts, ((0, m_pad - m), (0, 0)))
    grid = (m_pad // tm_eff,)

    in_specs = [pl.BlockSpec((tm_eff, 3), lambda i: (i, 0))]
    weights = []
    for name in PACK_ORDER:
        arr = packed[name]
        weights.append(arr)
        nd = arr.ndim
        # Constant block index (0,...) -> the pipeline should not re-fetch
        # these per step.  TODO(synk): pipeline_mode=pl.Buffered(1) if a trace
        # shows re-DMA or VMEM pressure from double-buffered weights.
        in_specs.append(pl.BlockSpec(arr.shape, lambda i, nd=nd: (0,) * nd))

    # TODO(synk): output last dim is 64 (<128 lanes) so stores are masked; a
    # 2-points-per-row kron(I2,W) lane-dense layout was not implemented.
    out = pl.pallas_call(
        hybrid_kernel,
        out_shape=jax.ShapeDtypeStruct((m_pad, FEATURE_DIM), jnp.float32),
        grid=grid,
        in_specs=in_specs,
        out_specs=pl.BlockSpec((tm_eff, FEATURE_DIM), lambda i: (i, 0)),
        compiler_params=pltpu.CompilerParams(
            dimension_semantics=("parallel",),
            vmem_limit_bytes=vmem_limit_bytes),
    )(pts, *weights)

    out = out[:m].reshape(b, n, FEATURE_DIM)
    if b == 1:                                       # PyTorch squeezes batch==1
        out = out[0]
    return out


# ---------------------------------------------------------------------------
# Pure-JAX reference mirroring the PyTorch module (unfused), used to verify
# that the fusion / block-diagonal rewrites preserve semantics.
# ---------------------------------------------------------------------------
def reference_forward(points, raw):
    pts = points.reshape(-1, 3).astype(jnp.float32)
    relu = lambda v: jnp.maximum(v, 0.0)
    sigmoid = jax.nn.sigmoid

    def lin(x, name, bf16=True):
        w, b = raw[name + "_w"], raw[name + "_b"]
        if bf16:
            x, w = x.astype(jnp.bfloat16), w.astype(jnp.bfloat16)
        return jnp.dot(x, w, preferred_element_type=jnp.float32) + b

    local = lin(relu(lin(pts, "local1", bf16=False)), "local2")
    temporal = lin(relu(lin(local, "temp1")), "temp2")
    pos_enc = lin(relu(lin(pts, "pos1", bf16=False)), "pos2")
    spatial_w = lin(relu(lin(local, "spat1")), "spat2")
    spatial = local + spatial_w * pos_enc
    importance = sigmoid(lin(relu(lin(temporal, "imp1")), "imp2"))
    condition = lin(relu(lin(spatial, "cond1")), "cond2")
    gate = sigmoid(lin(jnp.concatenate([temporal, condition], axis=-1), "gate"))
    adapted = temporal * importance * gate + condition * (1.0 - gate)
    psum = jnp.sum(pts, axis=-1, keepdims=True)
    sfs = []
    for i, s in enumerate(SCALES):
        sf = lin(relu(lin(adapted, f"st1_{i}")), f"st2_{i}")
        sfs.append(sf * (1.0 + jnp.tanh(psum / s)))
    attw = jax.nn.softmax(
        lin(relu(lin(jnp.concatenate(sfs, axis=-1), "sa1")), "sa2"), axis=-1)
    weighted = sum(sfs[i] * attw[:, i:i + 1] for i in range(len(SCALES)))
    enhanced = lin(relu(lin(weighted, "enh1")), "enh2")
    multi = enhanced + adapted
    return relu(lin(jnp.concatenate([multi, spatial], axis=-1), "fuse"))


if __name__ == "__main__":
    key = jax.random.PRNGKey(0)
    kp, kx, kt, kx2 = jax.random.split(key, 4)
    raw = init_raw_params(kp)
    packed = pack_params(raw)

    # --- small canonical shape ---
    B, N = 2, 16
    points = jax.random.normal(kx, (B, N, 3), jnp.float32)
    time = jax.random.normal(kt, (B, N, 1), jnp.float32)     # unused by forward
    out = jax.block_until_ready(hybrid_feature_extractor(points, time, packed))
    assert out.shape == (B, N, FEATURE_DIM), out.shape
    ref = jax.block_until_ready(reference_forward(points, raw))
    np.testing.assert_allclose(np.asarray(out),
                               np.asarray(ref).reshape(B, N, FEATURE_DIM),
                               rtol=1e-2, atol=1e-2)

    # --- ragged shape, explicit small tile to exercise padding + multi-step grid ---
    B2, N2 = 3, 123
    points2 = jax.random.normal(kx2, (B2, N2, 3), jnp.float32)
    out2 = jax.block_until_ready(
        hybrid_feature_extractor(points2, None, packed, tm=128))
    assert out2.shape == (B2, N2, FEATURE_DIM), out2.shape
    ref2 = jax.block_until_ready(reference_forward(points2, raw))
    np.testing.assert_allclose(np.asarray(out2),
                               np.asarray(ref2).reshape(B2, N2, FEATURE_DIM),
                               rtol=1e-2, atol=1e-2)

    print("KERNEL_OK")
</pallas_src>

<mosaic_0001>
module attributes {stable_mosaic.version = 11 : i64} {
  func.func @hybrid_kernel(%arg0: i32, %arg1: memref<32x3xf32, #tpu.memory_space<vmem>>, %arg2: memref<3x64xf32, #tpu.memory_space<vmem>>, %arg3: memref<3x64x128xbf16, #tpu.memory_space<vmem>>, %arg4: memref<2x64x96xbf16, #tpu.memory_space<vmem>>, %arg5: memref<96x128xbf16, #tpu.memory_space<vmem>>, %arg6: memref<96x192xbf16, #tpu.memory_space<vmem>>, %arg7: memref<4x64x64xbf16, #tpu.memory_space<vmem>>, %arg8: memref<192x64xbf16, #tpu.memory_space<vmem>>, %arg9: memref<2x64x32xbf16, #tpu.memory_space<vmem>>, %arg10: memref<32x64xbf16, #tpu.memory_space<vmem>>, %arg11: memref<4x128xf32, #tpu.memory_space<vmem>>, %arg12: memref<2x96xf32, #tpu.memory_space<vmem>>, %arg13: memref<5x64xf32, #tpu.memory_space<vmem>>, %arg14: memref<2x192xf32, #tpu.memory_space<vmem>>, %arg15: memref<2x32xf32, #tpu.memory_space<vmem>>, %arg16: memref<32x64xf32, #tpu.memory_space<vmem>>) attributes {dimension_semantics = [#tpu.dimension_semantics<parallel>], iteration_bounds = array<i64: 1>, scalar_prefetch = 0 : i64, scratch_operands = 0 : i64, tpu.core_type = #tpu.core_type<tc>, window_params = [{transform_indices = @transform_0, window_bounds = array<i64: 32, 3>}, {pipeline_mode = #tpu.pipeline_mode<synchronous>, transform_indices = @transform_1, window_bounds = array<i64: 3, 64>}, {pipeline_mode = #tpu.pipeline_mode<synchronous>, transform_indices = @transform_2, window_bounds = array<i64: 3, 64, 128>}, {pipeline_mode = #tpu.pipeline_mode<synchronous>, transform_indices = @transform_3, window_bounds = array<i64: 2, 64, 96>}, {pipeline_mode = #tpu.pipeline_mode<synchronous>, transform_indices = @transform_4, window_bounds = array<i64: 96, 128>}, {pipeline_mode = #tpu.pipeline_mode<synchronous>, transform_indices = @transform_5, window_bounds = array<i64: 96, 192>}, {pipeline_mode = #tpu.pipeline_mode<synchronous>, transform_indices = @transform_6, window_bounds = array<i64: 4, 64, 64>}, {pipeline_mode = #tpu.pipeline_mode<synchronous>, transform_indices = @transform_7, window_bounds = array<i64: 192, 64>}, {pipeline_mode = #tpu.pipeline_mode<synchronous>, transform_indices = @transform_8, window_bounds = array<i64: 2, 64, 32>}, {pipeline_mode = #tpu.pipeline_mode<synchronous>, transform_indices = @transform_9, window_bounds = array<i64: 32, 64>}, {pipeline_mode = #tpu.pipeline_mode<synchronous>, transform_indices = @transform_10, window_bounds = array<i64: 4, 128>}, {pipeline_mode = #tpu.pipeline_mode<synchronous>, transform_indices = @transform_11, window_bounds = array<i64: 2, 96>}, {pipeline_mode = #tpu.pipeline_mode<synchronous>, transform_indices = @transform_12, window_bounds = array<i64: 5, 64>}, {pipeline_mode = #tpu.pipeline_mode<synchronous>, transform_indices = @transform_13, window_bounds = array<i64: 2, 192>}, {pipeline_mode = #tpu.pipeline_mode<synchronous>, transform_indices = @transform_14, window_bounds = array<i64: 2, 32>}, {transform_indices = @transform_15, window_bounds = array<i64: 32, 64>}]} {
    %c0 = arith.constant 0 : index
    %c0_0 = arith.constant 0 : index
    %0 = vector.load %arg1[%c0, %c0_0] : memref<32x3xf32, #tpu.memory_space<vmem>>, vector<32x3xf32>
    %c0_1 = arith.constant 0 : index
    %c0_2 = arith.constant 0 : index
    %1 = vector.load %arg2[%c0_1, %c0_2] : memref<3x64xf32, #tpu.memory_space<vmem>>, vector<3x64xf32>
    %2 = vector.extract_strided_slice %0 {offsets = [0, 0], sizes = [32, 1], strides = [1, 1]} : vector<32x3xf32> to vector<32x1xf32>
    %3 = vector.extract_strided_slice %1 {offsets = [0, 0], sizes = [1, 64], strides = [1, 1]} : vector<3x64xf32> to vector<1x64xf32>
    %4 = vector.broadcast %2 : vector<32x1xf32> to vector<32x64xf32>
    %5 = vector.broadcast %3 : vector<1x64xf32> to vector<32x64xf32>
    %6 = arith.mulf %4, %5 : vector<32x64xf32>
    %7 = vector.extract_strided_slice %0 {offsets = [0, 1], sizes = [32, 1], strides = [1, 1]} : vector<32x3xf32> to vector<32x1xf32>
    %8 = vector.extract_strided_slice %1 {offsets = [1, 0], sizes = [1, 64], strides = [1, 1]} : vector<3x64xf32> to vector<1x64xf32>
    %9 = vector.broadcast %7 : vector<32x1xf32> to vector<32x64xf32>
    %10 = vector.broadcast %8 : vector<1x64xf32> to vector<32x64xf32>
    %11 = arith.mulf %9, %10 : vector<32x64xf32>
    %12 = arith.addf %6, %11 : vector<32x64xf32>
    %13 = vector.extract_strided_slice %0 {offsets = [0, 2], sizes = [32, 1], strides = [1, 1]} : vector<32x3xf32> to vector<32x1xf32>
    %14 = vector.extract_strided_slice %1 {offsets = [2, 0], sizes = [1, 64], strides = [1, 1]} : vector<3x64xf32> to vector<1x64xf32>
    %15 = vector.broadcast %13 : vector<32x1xf32> to vector<32x64xf32>
    %16 = vector.broadcast %14 : vector<1x64xf32> to vector<32x64xf32>
    %17 = arith.mulf %15, %16 : vector<32x64xf32>
    %18 = arith.addf %12, %17 : vector<32x64xf32>
    %c0_3 = arith.constant 0 : index
    %c0_4 = arith.constant 0 : index
    %19 = vector.load %arg13[%c0_3, %c0_4] : memref<5x64xf32, #tpu.memory_space<vmem>>, vector<1x64xf32>
    %20 = vector.broadcast %19 : vector<1x64xf32> to vector<32x64xf32>
    %21 = arith.addf %18, %20 : vector<32x64xf32>
    %cst = arith.constant 0.000000e+00 : f32
    %22 = vector.broadcast %cst : f32 to vector<32x64xf32>
    %23 = arith.maximumf %21, %22 : vector<32x64xf32>
    %c0_5 = arith.constant 0 : index
    %c0_6 = arith.constant 0 : index
    %c0_7 = arith.constant 0 : index
    %24 = vector.load %arg3[%c0_5, %c0_6, %c0_7] : memref<3x64x128xbf16, #tpu.memory_space<vmem>>, vector<1x64x128xbf16>
    %25 = vector.shape_cast %24 : vector<1x64x128xbf16> to vector<64x128xbf16>
    %26 = arith.truncf %23 : vector<32x64xf32> to vector<32x64xbf16>
    %cst_8 = arith.constant dense<0.000000e+00> : vector<32x128xf32>
    %27 = tpu.matmul %26, %25, %cst_8 {dimension_numbers = #tpu.dot_dimension_numbers<[1], [0], [0], [1], [0, 0, 1, 1], [], []>} : vector<32x64xbf16>, vector<64x128xbf16>, vector<32x128xf32> -> vector<32x128xf32>
    %c0_9 = arith.constant 0 : index
    %c0_10 = arith.constant 0 : index
    %28 = vector.load %arg11[%c0_9, %c0_10] : memref<4x128xf32, #tpu.memory_space<vmem>>, vector<1x128xf32>
    %29 = vector.broadcast %28 : vector<1x128xf32> to vector<32x128xf32>
    %30 = arith.addf %27, %29 : vector<32x128xf32>
    %31 = vector.extract_strided_slice %30 {offsets = [0, 0], sizes = [32, 64], strides = [1, 1]} : vector<32x128xf32> to vector<32x64xf32>
    %32 = vector.extract_strided_slice %30 {offsets = [0, 64], sizes = [32, 64], strides = [1, 1]} : vector<32x128xf32> to vector<32x64xf32>
    %c0_11 = arith.constant 0 : index
    %c0_12 = arith.constant 0 : index
    %c0_13 = arith.constant 0 : index
    %33 = vector.load %arg4[%c0_11, %c0_12, %c0_13] : memref<2x64x96xbf16, #tpu.memory_space<vmem>>, vector<1x64x96xbf16>
    %34 = vector.shape_cast %33 : vector<1x64x96xbf16> to vector<64x96xbf16>
    %35 = arith.truncf %31 : vector<32x64xf32> to vector<32x64xbf16>
    %cst_14 = arith.constant dense<0.000000e+00> : vector<32x96xf32>
    %36 = tpu.matmul %35, %34, %cst_14 {dimension_numbers = #tpu.dot_dimension_numbers<[1], [0], [0], [1], [0, 0, 1, 1], [], []>} : vector<32x64xbf16>, vector<64x96xbf16>, vector<32x96xf32> -> vector<32x96xf32>
    %c0_15 = arith.constant 0 : index
    %c0_16 = arith.constant 0 : index
    %37 = vector.load %arg12[%c0_15, %c0_16] : memref<2x96xf32, #tpu.memory_space<vmem>>, vector<1x96xf32>
    %38 = vector.broadcast %37 : vector<1x96xf32> to vector<32x96xf32>
    %39 = arith.addf %36, %38 : vector<32x96xf32>
    %cst_17 = arith.constant 0.000000e+00 : f32
    %40 = vector.broadcast %cst_17 : f32 to vector<32x96xf32>
    %41 = arith.maximumf %39, %40 : vector<32x96xf32>
    %c0_18 = arith.constant 0 : index
    %c0_19 = arith.constant 0 : index
    %42 = vector.load %arg5[%c0_18, %c0_19] : memref<96x128xbf16, #tpu.memory_space<vmem>>, vector<96x128xbf16>
    %43 = arith.truncf %41 : vector<32x96xf32> to vector<32x96xbf16>
    %cst_20 = arith.constant dense<0.000000e+00> : vector<32x128xf32>
    %44 = tpu.matmul %43, %42, %cst_20 {dimension_numbers = #tpu.dot_dimension_numbers<[1], [0], [0], [1], [0, 0, 1, 1], [], []>} : vector<32x96xbf16>, vector<96x128xbf16>, vector<32x128xf32> -> vector<32x128xf32>
    %c1 = arith.constant 1 : index
    %c0_21 = arith.constant 0 : index
    %45 = vector.load %arg11[%c1, %c0_21] : memref<4x128xf32, #tpu.memory_space<vmem>>, vector<1x128xf32>
    %46 = vector.broadcast %45 : vector<1x128xf32> to vector<32x128xf32>
    %47 = arith.addf %44, %46 : vector<32x128xf32>
    %48 = vector.extract_strided_slice %47 {offsets = [0, 0], sizes = [32, 64], strides = [1, 1]} : vector<32x128xf32> to vector<32x64xf32>
    %49 = vector.extract_strided_slice %47 {offsets = [0, 64], sizes = [32, 64], strides = [1, 1]} : vector<32x128xf32> to vector<32x64xf32>
    %50 = arith.mulf %49, %32 : vector<32x64xf32>
    %51 = arith.addf %31, %50 : vector<32x64xf32>
    %c1_22 = arith.constant 1 : index
    %c0_23 = arith.constant 0 : index
    %c0_24 = arith.constant 0 : index
    %52 = vector.load %arg3[%c1_22, %c0_23, %c0_24] : memref<3x64x128xbf16, #tpu.memory_space<vmem>>, vector<1x64x128xbf16>
    %53 = vector.shape_cast %52 : vector<1x64x128xbf16> to vector<64x128xbf16>
    %54 = arith.truncf %48 : vector<32x64xf32> to vector<32x64xbf16>
    %cst_25 = arith.constant dense<0.000000e+00> : vector<32x128xf32>
    %55 = tpu.matmul %54, %53, %cst_25 {dimension_numbers = #tpu.dot_dimension_numbers<[1], [0], [0], [1], [0, 0, 1, 1], [], []>} : vector<32x64xbf16>, vector<64x128xbf16>, vector<32x128xf32> -> vector<32x128xf32>
    %c2 = arith.constant 2 : index
    %c0_26 = arith.constant 0 : index
    %56 = vector.load %arg11[%c2, %c0_26] : memref<4x128xf32, #tpu.memory_space<vmem>>, vector<1x128xf32>
    %57 = vector.broadcast %56 : vector<1x128xf32> to vector<32x128xf32>
    %58 = arith.addf %55, %57 : vector<32x128xf32>
    %c2_27 = arith.constant 2 : index
    %c0_28 = arith.constant 0 : index
    %c0_29 = arith.constant 0 : index
    %59 = vector.load %arg3[%c2_27, %c0_28, %c0_29] : memref<3x64x128xbf16, #tpu.memory_space<vmem>>, vector<1x64x128xbf16>
    %60 = vector.shape_cast %59 : vector<1x64x128xbf16> to vector<64x128xbf16>
    %61 = arith.truncf %51 : vector<32x64xf32> to vector<32x64xbf16>
    %cst_30 = arith.constant dense<0.000000e+00> : vector<32x128xf32>
    %62 = tpu.matmul %61, %60, %cst_30 {dimension_numbers = #tpu.dot_dimension_numbers<[1], [0], [0], [1], [0, 0, 1, 1], [], []>} : vector<32x64xbf16>, vector<64x128xbf16>, vector<32x128xf32> -> vector<32x128xf32>
    %c3 = arith.constant 3 : index
    %c0_31 = arith.constant 0 : index
    %63 = vector.load %arg11[%c3, %c0_31] : memref<4x128xf32, #tpu.memory_space<vmem>>, vector<1x128xf32>
    %64 = vector.broadcast %63 : vector<1x128xf32> to vector<32x128xf32>
    %65 = arith.addf %62, %64 : vector<32x128xf32>
    %66 = vector.extract_strided_slice %58 {offsets = [0, 0], sizes = [32, 64], strides = [1, 1]} : vector<32x128xf32> to vector<32x64xf32>
    %cst_32 = arith.constant 0.000000e+00 : f32
    %67 = vector.broadcast %cst_32 : f32 to vector<32x64xf32>
    %68 = arith.maximumf %66, %67 : vector<32x64xf32>
    %c0_33 = arith.constant 0 : index
    %c0_34 = arith.constant 0 : index
    %c0_35 = arith.constant 0 : index
    %69 = vector.load %arg7[%c0_33, %c0_34, %c0_35] : memref<4x64x64xbf16, #tpu.memory_space<vmem>>, vector<1x64x64xbf16>
    %70 = vector.shape_cast %69 : vector<1x64x64xbf16> to vector<64x64xbf16>
    %71 = arith.truncf %68 : vector<32x64xf32> to vector<32x64xbf16>
    %cst_36 = arith.constant dense<0.000000e+00> : vector<32x64xf32>
    %72 = tpu.matmul %71, %70, %cst_36 {dimension_numbers = #tpu.dot_dimension_numbers<[1], [0], [0], [1], [0, 0, 1, 1], [], []>} : vector<32x64xbf16>, vector<64x64xbf16>, vector<32x64xf32> -> vector<32x64xf32>
    %c1_37 = arith.constant 1 : index
    %c0_38 = arith.constant 0 : index
    %73 = vector.load %arg13[%c1_37, %c0_38] : memref<5x64xf32, #tpu.memory_space<vmem>>, vector<1x64xf32>
    %74 = vector.broadcast %73 : vector<1x64xf32> to vector<32x64xf32>
    %75 = arith.addf %72, %74 : vector<32x64xf32>
    %76 = arith.negf %75 : vector<32x64xf32>
    %77 = math.exp %76 : vector<32x64xf32>
    %cst_39 = arith.constant 1.000000e+00 : f32
    %78 = vector.broadcast %cst_39 : f32 to vector<32x64xf32>
    %79 = arith.addf %78, %77 : vector<32x64xf32>
    %80 = arith.divf %78, %79 : vector<32x64xf32>
    %81 = vector.extract_strided_slice %65 {offsets = [0, 0], sizes = [32, 64], strides = [1, 1]} : vector<32x128xf32> to vector<32x64xf32>
    %cst_40 = arith.constant 0.000000e+00 : f32
    %82 = vector.broadcast %cst_40 : f32 to vector<32x64xf32>
    %83 = arith.maximumf %81, %82 : vector<32x64xf32>
    %c1_41 = arith.constant 1 : index
    %c0_42 = arith.constant 0 : index
    %c0_43 = arith.constant 0 : index
    %84 = vector.load %arg7[%c1_41, %c0_42, %c0_43] : memref<4x64x64xbf16, #tpu.memory_space<vmem>>, vector<1x64x64xbf16>
    %85 = vector.shape_cast %84 : vector<1x64x64xbf16> to vector<64x64xbf16>
    %86 = arith.truncf %83 : vector<32x64xf32> to vector<32x64xbf16>
    %cst_44 = arith.constant dense<0.000000e+00> : vector<32x64xf32>
    %87 = tpu.matmul %86, %85, %cst_44 {dimension_numbers = #tpu.dot_dimension_numbers<[1], [0], [0], [1], [0, 0, 1, 1], [], []>} : vector<32x64xbf16>, vector<64x64xbf16>, vector<32x64xf32> -> vector<32x64xf32>
    %c2_45 = arith.constant 2 : index
    %c0_46 = arith.constant 0 : index
    %88 = vector.load %arg13[%c2_45, %c0_46] : memref<5x64xf32, #tpu.memory_space<vmem>>, vector<1x64xf32>
    %89 = vector.broadcast %88 : vector<1x64xf32> to vector<32x64xf32>
    %90 = arith.addf %87, %89 : vector<32x64xf32>
    %91 = vector.extract_strided_slice %58 {offsets = [0, 64], sizes = [32, 64], strides = [1, 1]} : vector<32x128xf32> to vector<32x64xf32>
    %c2_47 = arith.constant 2 : index
    %c0_48 = arith.constant 0 : index
    %c0_49 = arith.constant 0 : index
    %92 = vector.load %arg7[%c2_47, %c0_48, %c0_49] : memref<4x64x64xbf16, #tpu.memory_space<vmem>>, vector<1x64x64xbf16>
    %93 = vector.shape_cast %92 : vector<1x64x64xbf16> to vector<64x64xbf16>
    %94 = arith.truncf %90 : vector<32x64xf32> to vector<32x64xbf16>
    %cst_50 = arith.constant dense<0.000000e+00> : vector<32x64xf32>
    %95 = tpu.matmul %94, %93, %cst_50 {dimension_numbers = #tpu.dot_dimension_numbers<[1], [0], [0], [1], [0, 0, 1, 1], [], []>} : vector<32x64xbf16>, vector<64x64xbf16>, vector<32x64xf32> -> vector<32x64xf32>
    %96 = arith.addf %91, %95 : vector<32x64xf32>
    %97 = arith.negf %96 : vector<32x64xf32>
    %98 = math.exp %97 : vector<32x64xf32>
    %cst_51 = arith.constant 1.000000e+00 : f32
    %99 = vector.broadcast %cst_51 : f32 to vector<32x64xf32>
    %100 = arith.addf %99, %98 : vector<32x64xf32>
    %101 = arith.divf %99, %100 : vector<32x64xf32>
    %102 = arith.mulf %48, %80 : vector<32x64xf32>
    %103 = arith.mulf %102, %101 : vector<32x64xf32>
    %cst_52 = arith.constant 1.000000e+00 : f32
    %104 = vector.broadcast %cst_52 : f32 to vector<32x64xf32>
    %105 = arith.subf %104, %101 : vector<32x64xf32>
    %106 = arith.mulf %90, %105 : vector<32x64xf32>
    %107 = arith.addf %103, %106 : vector<32x64xf32>
    %cst_53 = arith.constant dense<0.000000e+00> : vector<32xf32>
    %108 = vector.multi_reduction <add>, %0, %cst_53 [1] : vector<32x3xf32> to vector<32xf32>
    %109 = vector.shape_cast %108 : vector<32xf32> to vector<32x1xf32>
    %c1_54 = arith.constant 1 : index
    %c0_55 = arith.constant 0 : index
    %c0_56 = arith.constant 0 : index
    %110 = vector.load %arg4[%c1_54, %c0_55, %c0_56] : memref<2x64x96xbf16, #tpu.memory_space<vmem>>, vector<1x64x96xbf16>
    %111 = vector.shape_cast %110 : vector<1x64x96xbf16> to vector<64x96xbf16>
    %112 = arith.truncf %107 : vector<32x64xf32> to vector<32x64xbf16>
    %cst_57 = arith.constant dense<0.000000e+00> : vector<32x96xf32>
    %113 = tpu.matmul %112, %111, %cst_57 {dimension_numbers = #tpu.dot_dimension_numbers<[1], [0], [0], [1], [0, 0, 1, 1], [], []>} : vector<32x64xbf16>, vector<64x96xbf16>, vector<32x96xf32> -> vector<32x96xf32>
    %c1_58 = arith.constant 1 : index
    %c0_59 = arith.constant 0 : index
    %114 = vector.load %arg12[%c1_58, %c0_59] : memref<2x96xf32, #tpu.memory_space<vmem>>, vector<1x96xf32>
    %115 = vector.broadcast %114 : vector<1x96xf32> to vector<32x96xf32>
    %116 = arith.addf %113, %115 : vector<32x96xf32>
    %cst_60 = arith.constant 0.000000e+00 : f32
    %117 = vector.broadcast %cst_60 : f32 to vector<32x96xf32>
    %118 = arith.maximumf %116, %117 : vector<32x96xf32>
    %c0_61 = arith.constant 0 : index
    %c0_62 = arith.constant 0 : index
    %119 = vector.load %arg6[%c0_61, %c0_62] : memref<96x192xbf16, #tpu.memory_space<vmem>>, vector<96x192xbf16>
    %120 = arith.truncf %118 : vector<32x96xf32> to vector<32x96xbf16>
    %cst_63 = arith.constant dense<0.000000e+00> : vector<32x192xf32>
    %121 = tpu.matmul %120, %119, %cst_63 {dimension_numbers = #tpu.dot_dimension_numbers<[1], [0], [0], [1], [0, 0, 1, 1], [], []>} : vector<32x96xbf16>, vector<96x192xbf16>, vector<32x192xf32> -> vector<32x192xf32>
    %c0_64 = arith.constant 0 : index
    %c0_65 = arith.constant 0 : index
    %122 = vector.load %arg14[%c0_64, %c0_65] : memref<2x192xf32, #tpu.memory_space<vmem>>, vector<1x192xf32>
    %123 = vector.broadcast %122 : vector<1x192xf32> to vector<32x192xf32>
    %124 = arith.addf %121, %123 : vector<32x192xf32>
    %c1_66 = arith.constant 1 : index
    %c0_67 = arith.constant 0 : index
    %125 = vector.load %arg14[%c1_66, %c0_67] : memref<2x192xf32, #tpu.memory_space<vmem>>, vector<1x192xf32>
    %126 = vector.broadcast %109 : vector<32x1xf32> to vector<32x192xf32>
    %127 = vector.broadcast %125 : vector<1x192xf32> to vector<32x192xf32>
    %128 = arith.mulf %126, %127 : vector<32x192xf32>
    %129 = math.tanh %128 : vector<32x192xf32>
    %cst_68 = arith.constant 1.000000e+00 : f32
    %130 = vector.broadcast %cst_68 : f32 to vector<32x192xf32>
    %131 = arith.addf %130, %129 : vector<32x192xf32>
    %132 = arith.mulf %124, %131 : vector<32x192xf32>
    %c0_69 = arith.constant 0 : index
    %c0_70 = arith.constant 0 : index
    %133 = vector.load %arg8[%c0_69, %c0_70] : memref<192x64xbf16, #tpu.memory_space<vmem>>, vector<192x64xbf16>
    %134 = arith.truncf %132 : vector<32x192xf32> to vector<32x192xbf16>
    %cst_71 = arith.constant dense<0.000000e+00> : vector<32x64xf32>
    %135 = tpu.matmul %134, %133, %cst_71 {dimension_numbers = #tpu.dot_dimension_numbers<[1], [0], [0], [1], [0, 0, 1, 1], [], []>} : vector<32x192xbf16>, vector<192x64xbf16>, vector<32x64xf32> -> vector<32x64xf32>
    %c3_72 = arith.constant 3 : index
    %c0_73 = arith.constant 0 : index
    %136 = vector.load %arg13[%c3_72, %c0_73] : memref<5x64xf32, #tpu.memory_space<vmem>>, vector<1x64xf32>
    %137 = vector.broadcast %136 : vector<1x64xf32> to vector<32x64xf32>
    %138 = arith.addf %135, %137 : vector<32x64xf32>
    %cst_74 = arith.constant 0.000000e+00 : f32
    %139 = vector.broadcast %cst_74 : f32 to vector<32x64xf32>
    %140 = arith.maximumf %138, %139 : vector<32x64xf32>
    %c1_75 = arith.constant 1 : index
    %c0_76 = arith.constant 0 : index
    %c0_77 = arith.constant 0 : index
    %141 = vector.load %arg9[%c1_75, %c0_76, %c0_77] : memref<2x64x32xbf16, #tpu.memory_space<vmem>>, vector<1x64x32xbf16>
    %142 = vector.shape_cast %141 : vector<1x64x32xbf16> to vector<64x32xbf16>
    %143 = arith.truncf %140 : vector<32x64xf32> to vector<32x64xbf16>
    %cst_78 = arith.constant dense<0.000000e+00> : vector<32x32xf32>
    %144 = tpu.matmul %143, %142, %cst_78 {dimension_numbers = #tpu.dot_dimension_numbers<[1], [0], [0], [1], [0, 0, 1, 1], [], []>} : vector<32x64xbf16>, vector<64x32xbf16>, vector<32x32xf32> -> vector<32x32xf32>
    %c1_79 = arith.constant 1 : index
    %c0_80 = arith.constant 0 : index
    %145 = vector.load %arg15[%c1_79, %c0_80] : memref<2x32xf32, #tpu.memory_space<vmem>>, vector<1x32xf32>
    %146 = vector.broadcast %145 : vector<1x32xf32> to vector<32x32xf32>
    %147 = arith.addf %144, %146 : vector<32x32xf32>
    %148 = vector.extract_strided_slice %147 {offsets = [0, 0], sizes = [32, 3], strides = [1, 1]} : vector<32x32xf32> to vector<32x3xf32>
    %cst_81 = arith.constant dense<0xFF800000> : vector<32xf32>
    %149 = vector.multi_reduction <maximumf>, %148, %cst_81 [1] : vector<32x3xf32> to vector<32xf32>
    %150 = vector.shape_cast %149 : vector<32xf32> to vector<32x1xf32>
    %151 = vector.broadcast %150 : vector<32x1xf32> to vector<32x3xf32>
    %152 = arith.subf %148, %151 : vector<32x3xf32>
    %153 = math.exp %152 : vector<32x3xf32>
    %cst_82 = arith.constant dense<0.000000e+00> : vector<32xf32>
    %154 = vector.multi_reduction <add>, %153, %cst_82 [1] : vector<32x3xf32> to vector<32xf32>
    %155 = vector.shape_cast %154 : vector<32xf32> to vector<32x1xf32>
    %156 = tpu.reciprocal %155 {approx = true} : vector<32x1xf32> -> vector<32x1xf32>
    %157 = vector.broadcast %156 : vector<32x1xf32> to vector<32x3xf32>
    %158 = arith.mulf %153, %157 : vector<32x3xf32>
    %159 = vector.extract_strided_slice %132 {offsets = [0, 0], sizes = [32, 64], strides = [1, 1]} : vector<32x192xf32> to vector<32x64xf32>
    %160 = vector.extract_strided_slice %158 {offsets = [0, 0], sizes = [32, 1], strides = [1, 1]} : vector<32x3xf32> to vector<32x1xf32>
    %161 = vector.broadcast %160 : vector<32x1xf32> to vector<32x64xf32>
    %162 = arith.mulf %159, %161 : vector<32x64xf32>
    %163 = vector.extract_strided_slice %132 {offsets = [0, 64], sizes = [32, 64], strides = [1, 1]} : vector<32x192xf32> to vector<32x64xf32>
    %164 = vector.extract_strided_slice %158 {offsets = [0, 1], sizes = [32, 1], strides = [1, 1]} : vector<32x3xf32> to vector<32x1xf32>
    %165 = vector.broadcast %164 : vector<32x1xf32> to vector<32x64xf32>
    %166 = arith.mulf %163, %165 : vector<32x64xf32>
    %167 = arith.addf %162, %166 : vector<32x64xf32>
    %168 = vector.extract_strided_slice %132 {offsets = [0, 128], sizes = [32, 64], strides = [1, 1]} : vector<32x192xf32> to vector<32x64xf32>
    %169 = vector.extract_strided_slice %158 {offsets = [0, 2], sizes = [32, 1], strides = [1, 1]} : vector<32x3xf32> to vector<32x1xf32>
    %170 = vector.broadcast %169 : vector<32x1xf32> to vector<32x64xf32>
    %171 = arith.mulf %168, %170 : vector<32x64xf32>
    %172 = arith.addf %167, %171 : vector<32x64xf32>
    %c0_83 = arith.constant 0 : index
    %c0_84 = arith.constant 0 : index
    %c0_85 = arith.constant 0 : index
    %173 = vector.load %arg9[%c0_83, %c0_84, %c0_85] : memref<2x64x32xbf16, #tpu.memory_space<vmem>>, vector<1x64x32xbf16>
    %174 = vector.shape_cast %173 : vector<1x64x32xbf16> to vector<64x32xbf16>
    %175 = arith.truncf %172 : vector<32x64xf32> to vector<32x64xbf16>
    %cst_86 = arith.constant dense<0.000000e+00> : vector<32x32xf32>
    %176 = tpu.matmul %175, %174, %cst_86 {dimension_numbers = #tpu.dot_dimension_numbers<[1], [0], [0], [1], [0, 0, 1, 1], [], []>} : vector<32x64xbf16>, vector<64x32xbf16>, vector<32x32xf32> -> vector<32x32xf32>
    %c0_87 = arith.constant 0 : index
    %c0_88 = arith.constant 0 : index
    %177 = vector.load %arg15[%c0_87, %c0_88] : memref<2x32xf32, #tpu.memory_space<vmem>>, vector<1x32xf32>
    %178 = vector.broadcast %177 : vector<1x32xf32> to vector<32x32xf32>
    %179 = arith.addf %176, %178 : vector<32x32xf32>
    %cst_89 = arith.constant 0.000000e+00 : f32
    %180 = vector.broadcast %cst_89 : f32 to vector<32x32xf32>
    %181 = arith.maximumf %179, %180 : vector<32x32xf32>
    %c0_90 = arith.constant 0 : index
    %c0_91 = arith.constant 0 : index
    %182 = vector.load %arg10[%c0_90, %c0_91] : memref<32x64xbf16, #tpu.memory_space<vmem>>, vector<32x64xbf16>
    %183 = arith.truncf %181 : vector<32x32xf32> to vector<32x32xbf16>
    %cst_92 = arith.constant dense<0.000000e+00> : vector<32x64xf32>
    %184 = tpu.matmul %183, %182, %cst_92 {dimension_numbers = #tpu.dot_dimension_numbers<[1], [0], [0], [1], [0, 0, 1, 1], [], []>} : vector<32x32xbf16>, vector<32x64xbf16>, vector<32x64xf32> -> vector<32x64xf32>
    %c4 = arith.constant 4 : index
    %c0_93 = arith.constant 0 : index
    %185 = vector.load %arg13[%c4, %c0_93] : memref<5x64xf32, #tpu.memory_space<vmem>>, vector<1x64xf32>
    %186 = vector.broadcast %185 : vector<1x64xf32> to vector<32x64xf32>
    %187 = arith.addf %184, %186 : vector<32x64xf32>
    %188 = arith.addf %187, %107 : vector<32x64xf32>
    %c3_94 = arith.constant 3 : index
    %c0_95 = arith.constant 0 : index
    %c0_96 = arith.constant 0 : index
    %189 = vector.load %arg7[%c3_94, %c0_95, %c0_96] : memref<4x64x64xbf16, #tpu.memory_space<vmem>>, vector<1x64x64xbf16>
    %190 = vector.shape_cast %189 : vector<1x64x64xbf16> to vector<64x64xbf16>
    %191 = arith.truncf %188 : vector<32x64xf32> to vector<32x64xbf16>
    %cst_97 = arith.constant dense<0.000000e+00> : vector<32x64xf32>
    %192 = tpu.matmul %191, %190, %cst_97 {dimension_numbers = #tpu.dot_dimension_numbers<[1], [0], [0], [1], [0, 0, 1, 1], [], []>} : vector<32x64xbf16>, vector<64x64xbf16>, vector<32x64xf32> -> vector<32x64xf32>
    %193 = vector.extract_strided_slice %65 {offsets = [0, 64], sizes = [32, 64], strides = [1, 1]} : vector<32x128xf32> to vector<32x64xf32>
    %194 = arith.addf %192, %193 : vector<32x64xf32>
    %cst_98 = arith.constant 0.000000e+00 : f32
    %195 = vector.broadcast %cst_98 : f32 to vector<32x64xf32>
    %196 = arith.maximumf %194, %195 : vector<32x64xf32>
    %c0_99 = arith.constant 0 : index
    %c0_100 = arith.constant 0 : index
    %197 = vector.load %arg16[%c0_99, %c0_100] : memref<32x64xf32, #tpu.memory_space<vmem>>, vector<32x64xf32>
    tpu.vector_store %arg16[%c0_99, %c0_100], %196 {strides = array<i32>} : memref<32x64xf32, #tpu.memory_space<vmem>>, vector<32x64xf32>,
    return
  }
  func.func @transform_0(%arg0: i32) -> (i32, i32) {
    %c0_i32 = arith.constant 0 : i32
    %c0_i32_0 = arith.constant 0 : i32
    return %arg0, %c0_i32 : i32, i32
  }
  func.func @transform_1(%arg0: i32) -> (i32, i32) {
    %c0_i32 = arith.constant 0 : i32
    %c0_i32_0 = arith.constant 0 : i32
    %c0_i32_1 = arith.constant 0 : i32
    return %c0_i32, %c0_i32_0 : i32, i32
  }
  func.func @transform_2(%arg0: i32) -> (i32, i32, i32) {
    %c0_i32 = arith.constant 0 : i32
    %c0_i32_0 = arith.constant 0 : i32
    %c0_i32_1 = arith.constant 0 : i32
    %c0_i32_2 = arith.constant 0 : i32
    return %c0_i32, %c0_i32_0, %c0_i32_1 : i32, i32, i32
  }
  func.func @transform_3(%arg0: i32) -> (i32, i32, i32) {
    %c0_i32 = arith.constant 0 : i32
    %c0_i32_0 = arith.constant 0 : i32
    %c0_i32_1 = arith.constant 0 : i32
    %c0_i32_2 = arith.constant 0 : i32
    return %c0_i32, %c0_i32_0, %c0_i32_1 : i32, i32, i32
  }
  func.func @transform_4(%arg0: i32) -> (i32, i32) {
    %c0_i32 = arith.constant 0 : i32
    %c0_i32_0 = arith.constant 0 : i32
    %c0_i32_1 = arith.constant 0 : i32
    return %c0_i32, %c0_i32_0 : i32, i32
  }
  func.func @transform_5(%arg0: i32) -> (i32, i32) {
    %c0_i32 = arith.constant 0 : i32
    %c0_i32_0 = arith.constant 0 : i32
    %c0_i32_1 = arith.constant 0 : i32
    return %c0_i32, %c0_i32_0 : i32, i32
  }
  func.func @transform_6(%arg0: i32) -> (i32, i32, i32) {
    %c0_i32 = arith.constant 0 : i32
    %c0_i32_0 = arith.constant 0 : i32
    %c0_i32_1 = arith.constant 0 : i32
    %c0_i32_2 = arith.constant 0 : i32
    return %c0_i32, %c0_i32_0, %c0_i32_1 : i32, i32, i32
  }
  func.func @transform_7(%arg0: i32) -> (i32, i32) {
    %c0_i32 = arith.constant 0 : i32
    %c0_i32_0 = arith.constant 0 : i32
    %c0_i32_1 = arith.constant 0 : i32
    return %c0_i32, %c0_i32_0 : i32, i32
  }
  func.func @transform_8(%arg0: i32) -> (i32, i32, i32) {
    %c0_i32 = arith.constant 0 : i32
    %c0_i32_0 = arith.constant 0 : i32
    %c0_i32_1 = arith.constant 0 : i32
    %c0_i32_2 = arith.constant 0 : i32
    return %c0_i32, %c0_i32_0, %c0_i32_1 : i32, i32, i32
  }
  func.func @transform_9(%arg0: i32) -> (i32, i32) {
    %c0_i32 = arith.constant 0 : i32
    %c0_i32_0 = arith.constant 0 : i32
    %c0_i32_1 = arith.constant 0 : i32
    return %c0_i32, %c0_i32_0 : i32, i32
  }
  func.func @transform_10(%arg0: i32) -> (i32, i32) {
    %c0_i32 = arith.constant 0 : i32
    %c0_i32_0 = arith.constant 0 : i32
    %c0_i32_1 = arith.constant 0 : i32
    return %c0_i32, %c0_i32_0 : i32, i32
  }
  func.func @transform_11(%arg0: i32) -> (i32, i32) {
    %c0_i32 = arith.constant 0 : i32
    %c0_i32_0 = arith.constant 0 : i32
    %c0_i32_1 = arith.constant 0 : i32
    return %c0_i32, %c0_i32_0 : i32, i32
  }
  func.func @transform_12(%arg0: i32) -> (i32, i32) {
    %c0_i32 = arith.constant 0 : i32
    %c0_i32_0 = arith.constant 0 : i32
    %c0_i32_1 = arith.constant 0 : i32
    return %c0_i32, %c0_i32_0 : i32, i32
  }
  func.func @transform_13(%arg0: i32) -> (i32, i32) {
    %c0_i32 = arith.constant 0 : i32
    %c0_i32_0 = arith.constant 0 : i32
    %c0_i32_1 = arith.constant 0 : i32
    return %c0_i32, %c0_i32_0 : i32, i32
  }
  func.func @transform_14(%arg0: i32) -> (i32, i32) {
    %c0_i32 = arith.constant 0 : i32
    %c0_i32_0 = arith.constant 0 : i32
    %c0_i32_1 = arith.constant 0 : i32
    return %c0_i32, %c0_i32_0 : i32, i32
  }
  func.func @transform_15(%arg0: i32) -> (i32, i32) {
    %c0_i32 = arith.constant 0 : i32
    %c0_i32_0 = arith.constant 0 : i32
    return %arg0, %c0_i32 : i32, i32
  }
}

</mosaic_0001>

<llo_original>
// kernel: tpu_custom_call.1
$region0: #{tpu_custom_call.1}
  #allocation0 [shape = 'u32[]', space=smem, size = 0x4, offset = 0x4, fixed_abs, tag = 'smem constant byte address 0x4 - core index']
  #allocation1 [shape = 'u32[144,128]{1,0:T(1,128)}', space=vmem, size = 0x12000, scoped, tag = 'internal scratch']
  %s0 = inlined_call_operand.hbm [shape: f32[32,3], index: 0, kind: input, shape index: {}]
  %s1 = inlined_call_operand.hbm [shape: f32[3,64], index: 1, kind: input, shape index: {}]
  %s2 = inlined_call_operand.hbm [shape: bf16[3,64,128], index: 2, kind: input, shape index: {}]
  %s3 = inlined_call_operand.hbm [shape: bf16[2,64,96], index: 3, kind: input, shape index: {}]
  %s4 = inlined_call_operand.hbm [shape: bf16[96,128], index: 4, kind: input, shape index: {}]
  %s5 = inlined_call_operand.hbm [shape: bf16[96,192], index: 5, kind: input, shape index: {}]
  %s6 = inlined_call_operand.hbm [shape: bf16[4,64,64], index: 6, kind: input, shape index: {}]
  %s7 = inlined_call_operand.hbm [shape: bf16[192,64], index: 7, kind: input, shape index: {}]
  %s8 = inlined_call_operand.hbm [shape: bf16[2,64,32], index: 8, kind: input, shape index: {}]
  %s9 = inlined_call_operand.hbm [shape: bf16[32,64], index: 9, kind: input, shape index: {}]
  %s10 = inlined_call_operand.hbm [shape: f32[4,128], index: 10, kind: input, shape index: {}]
  %s11 = inlined_call_operand.hbm [shape: f32[2,96], index: 11, kind: input, shape index: {}]
  %s12 = inlined_call_operand.hbm [shape: f32[5,64], index: 12, kind: input, shape index: {}]
  %s13 = inlined_call_operand.hbm [shape: f32[2,192], index: 13, kind: input, shape index: {}]
  %s14 = inlined_call_operand.hbm [shape: f32[2,32], index: 14, kind: input, shape index: {}]
  %s15 = inlined_call_operand.hbm [shape: f32[32,64], index: 15, kind: output, shape index: {}]
  %s16 = sld [smem:[#allocation0]]
  $region130: #{tpu_custom_call.1} parent=0
    _
  %s18 = ssub.s32 1, %s16
  %s19 = scalar_select 0, %s18, %s16
  $region1: #{tpu_custom_call.1} parent=0
    #allocation2 [shape = 'u8[16384]{0}', space=vmem, size = 0x4000, scoped, tag = 'input window, operand 0, single buffered']
    #allocation3 [shape = 's32[1]{0}', space=sflag, size = 0x4, scoped, tag = 'scoped memory for tpu_custom_call.1']
    #allocation4 [shape = 's32[1]{0}', space=sflag, size = 0x4, scoped, tag = 'scoped memory for tpu_custom_call.1']
    #allocation5 [shape = 'u8[2048]{0}', space=vmem, size = 0x800, scoped, tag = 'input window, operand 1, single buffered']
    #allocation6 [shape = 's32[1]{0}', space=sflag, size = 0x4, scoped, tag = 'scoped memory for tpu_custom_call.1']
    #allocation7 [shape = 'u8[49152]{0}', space=vmem, size = 0xc000, scoped, tag = 'input window, operand 2, single buffered']
    #allocation8 [shape = 'u8[32768]{0}', space=vmem, size = 0x8000, scoped, tag = 'input window, operand 3, single buffered']
    #allocation9 [shape = 's32[1]{0}', space=sflag, size = 0x4, scoped, tag = 'scoped memory for tpu_custom_call.1']
    #allocation10 [shape = 'u8[24576]{0}', space=vmem, size = 0x6000, scoped, tag = 'input window, operand 4, single buffered']
    #allocation11 [shape = 'u8[49152]{0}', space=vmem, size = 0xc000, scoped, tag = 'input window, operand 5, single buffered']
    #allocation12 [shape = 's32[1]{0}', space=sflag, size = 0x4, scoped, tag = 'scoped memory for tpu_custom_call.1']
    #allocation13 [shape = 'u8[65536]{0}', space=vmem, size = 0x10000, scoped, tag = 'input window, operand 6, single buffered']
    #allocation14 [shape = 'u8[49152]{0}', space=vmem, size = 0xc000, scoped, tag = 'input window, operand 7, single buffered']
    #allocation15 [shape = 's32[1]{0}', space=sflag, size = 0x4, scoped, tag = 'scoped memory for tpu_custom_call.1']
    #allocation16 [shape = 'u8[32768]{0}', space=vmem, size = 0x8000, scoped, tag = 'input window, operand 8, single buffered']
    #allocation17 [shape = 'u8[8192]{0}', space=vmem, size = 0x2000, scoped, tag = 'input window, operand 9, single buffered']
    #allocation18 [shape = 's32[1]{0}', space=sflag, size = 0x4, scoped, tag = 'scoped memory for tpu_custom_call.1']
    #allocation19 [shape = 'u8[2048]{0}', space=vmem, size = 0x800, scoped, tag = 'input window, operand 10, single buffered']
    #allocation20 [shape = 'u8[1024]{0}', space=vmem, size = 0x400, scoped, tag = 'input window, operand 11, single buffered']
    #allocation21 [shape = 's32[1]{0}', space=sflag, size = 0x4, scoped, tag = 'scoped memory for tpu_custom_call.1']
    #allocation22 [shape = 'u8[4096]{0}', space=vmem, size = 0x1000, scoped, tag = 'input window, operand 12, single buffered']
    #allocation23 [shape = 'u8[2048]{0}', space=vmem, size = 0x800, scoped, tag = 'input window, operand 13, single buffered']
    #allocation24 [shape = 's32[1]{0}', space=sflag, size = 0x4, scoped, tag = 'scoped memory for tpu_custom_call.1']
    #allocation25 [shape = 'u8[1024]{0}', space=vmem, size = 0x400, scoped, tag = 'input window, operand 14, single buffered']
    #allocation26 [shape = 'u8[16384]{0}', space=vmem, size = 0x4000, scoped, tag = 'output window, operand 0, single buffered']
    %20 = vsyncpa [#allocation3], 0
    %21 = vsyncpa [#allocation6], 0
    %22 = vsyncpa [#allocation9], 0
    %23 = vsyncpa [#allocation12], 0
    %24 = vsyncpa [#allocation15], 0
    %25 = vsyncpa [#allocation18], 0
    %26 = vsyncpa [#allocation21], 0
    %27 = vsyncpa [#allocation24], 0
    %28 = vsyncpa [#allocation4], 0
    // Predicated region
    $region2: #{tpu_custom_call.1} parent=1 // pred_check
      _
    $region3: #{tpu_custom_call.1} parent=1 // pred_check_branch
      %30 = sbr.rel (0) target = $region5
    $region4: #{tpu_custom_call.1} parent=1 // pred_region
      %s32 = ssub.s32 512, 512
      %33 = vsyncadd [#allocation3], %s32
      %s34 = sshll.u32 [#allocation2], 4
      %s35 = int_to_ptr.vmem [resolvable:$true] %s34
      %40 = dma.hbm_to_vmem [thread:$0]  %s0, 512, %s35, [#allocation3], 128, 128, 8
    $region5: #{tpu_custom_call.1} parent=1 // pred_fallthru
      _
    // Predicated region
    $region6: #{tpu_custom_call.1} parent=1 // pred_check
      _
    $region7: #{tpu_custom_call.1} parent=1 // pred_check_branch
      %42 = sbr.rel (0) target = $region9
    $region8: #{tpu_custom_call.1} parent=1 // pred_region
      %s44 = ssub.s32 64, 64
      %45 = vsyncadd [#allocation6], %s44
      %s47 = sshll.u32 [#allocation5], 4
      %s48 = int_to_ptr.vmem [resolvable:$true] %s47
      %50 = dma.hbm_to_vmem [thread:$0]  %s1, 64, %s48, [#allocation6]
    $region9: #{tpu_custom_call.1} parent=1 // pred_fallthru
      _
    // Predicated region
    $region10: #{tpu_custom_call.1} parent=1 // pred_check
      _
    $region11: #{tpu_custom_call.1} parent=1 // pred_check_branch
      %52 = sbr.rel (0) target = $region13
    $region12: #{tpu_custom_call.1} parent=1 // pred_region
      %s54 = ssub.s32 1536, 1536
      %55 = vsyncadd [#allocation6], %s54
      %s56 = sshll.u32 [#allocation7], 4
      %s57 = int_to_ptr.vmem [resolvable:$true] %s56
      %62 = dma.hbm_to_vmem [thread:$0]  %s2, 1536, %s57, [#allocation6], 64, 64, 4
    $region13: #{tpu_custom_call.1} parent=1 // pred_fallthru
      _
    // Predicated region
    $region14: #{tpu_custom_call.1} parent=1 // pred_check
      _
    $region15: #{tpu_custom_call.1} parent=1 // pred_check_branch
      %64 = sbr.rel (0) target = $region17
    $region16: #{tpu_custom_call.1} parent=1 // pred_region
      %s66 = ssub.s32 1024, 1024
      %67 = vsyncadd [#allocation9], %s66
      %s68 = sshll.u32 [#allocation8], 4
      %s69 = int_to_ptr.vmem [resolvable:$true] %s68
      %74 = dma.hbm_to_vmem [thread:$0]  %s3, 1024, %s69, [#allocation9], 64, 64, 4
    $region17: #{tpu_custom_call.1} parent=1 // pred_fallthru
      _
    // Predicated region
    $region18: #{tpu_custom_call.1} parent=1 // pred_check
      _
    $region19: #{tpu_custom_call.1} parent=1 // pred_check_branch
      %76 = sbr.rel (0) target = $region21
    $region20: #{tpu_custom_call.1} parent=1 // pred_region
      %s78 = ssub.s32 768, 768
      %79 = vsyncadd [#allocation9], %s78
      %s80 = sshll.u32 [#allocation10], 4
      %s81 = int_to_ptr.vmem [resolvable:$true] %s80
      %86 = dma.hbm_to_vmem [thread:$0]  %s4, 768, %s81, [#allocation9], 64, 64, 4
    $region21: #{tpu_custom_call.1} parent=1 // pred_fallthru
      _
    // Predicated region
    $region22: #{tpu_custom_call.1} parent=1 // pred_check
      _
    $region23: #{tpu_custom_call.1} parent=1 // pred_check_branch
      %88 = sbr.rel (0) target = $region25
    $region24: #{tpu_custom_call.1} parent=1 // pred_region
      %s90 = ssub.s32 1536, 1536
      %91 = vsyncadd [#allocation12], %s90
      %s92 = sshll.u32 [#allocation11], 4
      %s93 = int_to_ptr.vmem [resolvable:$true] %s92
      %98 = dma.hbm_to_vmem [thread:$0]  %s5, 1536, %s93, [#allocation12], 128, 128, 8
    $region25: #{tpu_custom_call.1} parent=1 // pred_fallthru
      _
    // Predicated region
    $region26: #{tpu_custom_call.1} parent=1 // pred_check
      _
    $region27: #{tpu_custom_call.1} parent=1 // pred_check_branch
      %100 = sbr.rel (0) target = $region29
    $region28: #{tpu_custom_call.1} parent=1 // pred_region
      %s102 = ssub.s32 2048, 2048
      %103 = vsyncadd [#allocation12], %s102
      %s104 = sshll.u32 [#allocation13], 4
      %s105 = int_to_ptr.vmem [resolvable:$true] %s104
      %110 = dma.hbm_to_vmem [thread:$0]  %s6, 2048, %s105, [#allocation12], 64, 64, 4
    $region29: #{tpu_custom_call.1} parent=1 // pred_fallthru
      _
    // Predicated region
    $region30: #{tpu_custom_call.1} parent=1 // pred_check
      _
    $region31: #{tpu_custom_call.1} parent=1 // pred_check_branch
      %112 = sbr.rel (0) target = $region33
    $region32: #{tpu_custom_call.1} parent=1 // pred_region
      %s114 = ssub.s32 1536, 1536
      %115 = vsyncadd [#allocation15], %s114
      %s116 = sshll.u32 [#allocation14], 4
      %s117 = int_to_ptr.vmem [resolvable:$true] %s116
      %122 = dma.hbm_to_vmem [thread:$0]  %s7, 1536, %s117, [#allocation15], 64, 64, 4
    $region33: #{tpu_custom_call.1} parent=1 // pred_fallthru
      _
    // Predicated region
    $region34: #{tpu_custom_call.1} parent=1 // pred_check
      _
    $region35: #{tpu_custom_call.1} parent=1 // pred_check_branch
      %124 = sbr.rel (0) target = $region37
    $region36: #{tpu_custom_call.1} parent=1 // pred_region
      %s126 = ssub.s32 1024, 1024
      %127 = vsyncadd [#allocation15], %s126
      %s128 = sshll.u32 [#allocation16], 4
      %s129 = int_to_ptr.vmem [resolvable:$true] %s128
      %134 = dma.hbm_to_vmem [thread:$0]  %s8, 1024, %s129, [#allocation15], 64, 64, 4
    $region37: #{tpu_custom_call.1} parent=1 // pred_fallthru
      _
    // Predicated region
    $region38: #{tpu_custom_call.1} parent=1 // pred_check
      _
    $region39: #{tpu_custom_call.1} parent=1 // pred_check_branch
      %136 = sbr.rel (0) target = $region41
    $region40: #{tpu_custom_call.1} parent=1 // pred_region
      %s138 = ssub.s32 256, 256
      %139 = vsyncadd [#allocation18], %s138
      %s140 = sshll.u32 [#allocation17], 4
      %s141 = int_to_ptr.vmem [resolvable:$true] %s140
      %146 = dma.hbm_to_vmem [thread:$0]  %s9, 256, %s141, [#allocation18], 64, 64, 4
    $region41: #{tpu_custom_call.1} parent=1 // pred_fallthru
      _
    // Predicated region
    $region42: #{tpu_custom_call.1} parent=1 // pred_check
      _
    $region43: #{tpu_custom_call.1} parent=1 // pred_check_branch
      %148 = sbr.rel (0) target = $region45
    $region44: #{tpu_custom_call.1} parent=1 // pred_region
      %s150 = ssub.s32 64, 64
      %151 = vsyncadd [#allocation18], %s150
      %s153 = sshll.u32 [#allocation19], 4
      %s154 = int_to_ptr.vmem [resolvable:$true] %s153
      %156 = dma.hbm_to_vmem [thread:$0]  %s10, 64, %s154, [#allocation18]
    $region45: #{tpu_custom_call.1} parent=1 // pred_fallthru
      _
    // Predicated region
    $region46: #{tpu_custom_call.1} parent=1 // pred_check
      _
    $region47: #{tpu_custom_call.1} parent=1 // pred_check_branch
      %158 = sbr.rel (0) target = $region49
    $region48: #{tpu_custom_call.1} parent=1 // pred_region
      %s160 = ssub.s32 32, 32
      %161 = vsyncadd [#allocation21], %s160
      %s163 = sshll.u32 [#allocation20], 4
      %s164 = int_to_ptr.vmem [resolvable:$true] %s163
      %166 = dma.hbm_to_vmem [thread:$0]  %s11, 32, %s164, [#allocation21]
    $region49: #{tpu_custom_call.1} parent=1 // pred_fallthru
      _
    // Predicated region
    $region50: #{tpu_custom_call.1} parent=1 // pred_check
      _
    $region51: #{tpu_custom_call.1} parent=1 // pred_check_branch
      %168 = sbr.rel (0) target = $region53
    $region52: #{tpu_custom_call.1} parent=1 // pred_region
      %s170 = ssub.s32 128, 128
      %171 = vsyncadd [#allocation21], %s170
      %s173 = sshll.u32 [#allocation22], 4
      %s174 = int_to_ptr.vmem [resolvable:$true] %s173
      %176 = dma.hbm_to_vmem [thread:$0]  %s12, 128, %s174, [#allocation21]
    $region53: #{tpu_custom_call.1} parent=1 // pred_fallthru
      _
    // Predicated region
    $region54: #{tpu_custom_call.1} parent=1 // pred_check
      _
    $region55: #{tpu_custom_call.1} parent=1 // pred_check_branch
      %178 = sbr.rel (0) target = $region57
    $region56: #{tpu_custom_call.1} parent=1 // pred_region
      %s180 = ssub.s32 64, 64
      %181 = vsyncadd [#allocation24], %s180
      %s183 = sshll.u32 [#allocation23], 4
      %s184 = int_to_ptr.vmem [resolvable:$true] %s183
      %186 = dma.hbm_to_vmem [thread:$0]  %s13, 64, %s184, [#allocation24]
    $region57: #{tpu_custom_call.1} parent=1 // pred_fallthru
      _
    // Predicated region
    $region58: #{tpu_custom_call.1} parent=1 // pred_check
      _
    $region59: #{tpu_custom_call.1} parent=1 // pred_check_branch
      %188 = sbr.rel (0) target = $region61
    $region60: #{tpu_custom_call.1} parent=1 // pred_region
      %s190 = ssub.s32 32, 32
      %191 = vsyncadd [#allocation24], %s190
      %s193 = sshll.u32 [#allocation25], 4
      %s194 = int_to_ptr.vmem [resolvable:$true] %s193
      %196 = dma.hbm_to_vmem [thread:$0]  %s14, 32, %s194, [#allocation24]
    $region61: #{tpu_custom_call.1} parent=1 // pred_fallthru
      _
    // Predicated region
    $region62: #{tpu_custom_call.1} parent=1 // pred_check
      _
    $region63: #{tpu_custom_call.1} parent=1 // pred_check_branch
      %198 = sbr.rel (0) target = $region65
    $region64: #{tpu_custom_call.1} parent=1 // pred_region
      %199 = dma.done [#allocation3], 512
    $region65: #{tpu_custom_call.1} parent=1 // pred_fallthru
      _
    // Predicated region
    $region66: #{tpu_custom_call.1} parent=1 // pred_check
      _
    $region67: #{tpu_custom_call.1} parent=1 // pred_check_branch
      %201 = sbr.rel (0) target = $region69
    $region68: #{tpu_custom_call.1} parent=1 // pred_region
      %202 = dma.done [#allocation6], 64
    $region69: #{tpu_custom_call.1} parent=1 // pred_fallthru
      _
    // Predicated region
    $region70: #{tpu_custom_call.1} parent=1 // pred_check
      _
    $region71: #{tpu_custom_call.1} parent=1 // pred_check_branch
      %204 = sbr.rel (0) target = $region73
    $region72: #{tpu_custom_call.1} parent=1 // pred_region
      %205 = dma.done [#allocation6], 1536
    $region73: #{tpu_custom_call.1} parent=1 // pred_fallthru
      _
    // Predicated region
    $region74: #{tpu_custom_call.1} parent=1 // pred_check
      _
    $region75: #{tpu_custom_call.1} parent=1 // pred_check_branch
      %207 = sbr.rel (0) target = $region77
    $region76: #{tpu_custom_call.1} parent=1 // pred_region
      %208 = dma.done [#allocation9], 1024
    $region77: #{tpu_custom_call.1} parent=1 // pred_fallthru
      _
    // Predicated region
    $region78: #{tpu_custom_call.1} parent=1 // pred_check
      _
    $region79: #{tpu_custom_call.1} parent=1 // pred_check_branch
      %210 = sbr.rel (0) target = $region81
    $region80: #{tpu_custom_call.1} parent=1 // pred_region
      %211 = dma.done [#allocation9], 768
    $region81: #{tpu_custom_call.1} parent=1 // pred_fallthru
      _
    // Predicated region
    $region82: #{tpu_custom_call.1} parent=1 // pred_check
      _
    $region83: #{tpu_custom_call.1} parent=1 // pred_check_branch
      %213 = sbr.rel (0) target = $region85
    $region84: #{tpu_custom_call.1} parent=1 // pred_region
      %214 = dma.done [#allocation12], 1536
    $region85: #{tpu_custom_call.1} parent=1 // pred_fallthru
      _
    // Predicated region
    $region86: #{tpu_custom_call.1} parent=1 // pred_check
      _
    $region87: #{tpu_custom_call.1} parent=1 // pred_check_branch
      %216 = sbr.rel (0) target = $region89
    $region88: #{tpu_custom_call.1} parent=1 // pred_region
      %217 = dma.done [#allocation12], 2048
    $region89: #{tpu_custom_call.1} parent=1 // pred_fallthru
      _
    // Predicated region
    $region90: #{tpu_custom_call.1} parent=1 // pred_check
      _
    $region91: #{tpu_custom_call.1} parent=1 // pred_check_branch
      %219 = sbr.rel (0) target = $region93
    $region92: #{tpu_custom_call.1} parent=1 // pred_region
      %220 = dma.done [#allocation15], 1536
    $region93: #{tpu_custom_call.1} parent=1 // pred_fallthru
      _
    // Predicated region
    $region94: #{tpu_custom_call.1} parent=1 // pred_check
      _
    $region95: #{tpu_custom_call.1} parent=1 // pred_check_branch
      %222 = sbr.rel (0) target = $region97
    $region96: #{tpu_custom_call.1} parent=1 // pred_region
      %223 = dma.done [#allocation15], 1024
    $region97: #{tpu_custom_call.1} parent=1 // pred_fallthru
      _
    // Predicated region
    $region98: #{tpu_custom_call.1} parent=1 // pred_check
      _
    $region99: #{tpu_custom_call.1} parent=1 // pred_check_branch
      %225 = sbr.rel (0) target = $region101
    $region100: #{tpu_custom_call.1} parent=1 // pred_region
      %226 = dma.done [#allocation18], 256
    $region101: #{tpu_custom_call.1} parent=1 // pred_fallthru
      _
    // Predicated region
    $region102: #{tpu_custom_call.1} parent=1 // pred_check
      _
    $region103: #{tpu_custom_call.1} parent=1 // pred_check_branch
      %228 = sbr.rel (0) target = $region105
    $region104: #{tpu_custom_call.1} parent=1 // pred_region
      %229 = dma.done [#allocation18], 64
    $region105: #{tpu_custom_call.1} parent=1 // pred_fallthru
      _
    // Predicated region
    $region106: #{tpu_custom_call.1} parent=1 // pred_check
      _
    $region107: #{tpu_custom_call.1} parent=1 // pred_check_branch
      %231 = sbr.rel (0) target = $region109
    $region108: #{tpu_custom_call.1} parent=1 // pred_region
      %232 = dma.done [#allocation21], 32
    $region109: #{tpu_custom_call.1} parent=1 // pred_fallthru
      _
    // Predicated region
    $region110: #{tpu_custom_call.1} parent=1 // pred_check
      _
    $region111: #{tpu_custom_call.1} parent=1 // pred_check_branch
      %234 = sbr.rel (0) target = $region113
    $region112: #{tpu_custom_call.1} parent=1 // pred_region
      %235 = dma.done [#allocation21], 128
    $region113: #{tpu_custom_call.1} parent=1 // pred_fallthru
      _
    // Predicated region
    $region114: #{tpu_custom_call.1} parent=1 // pred_check
      _
    $region115: #{tpu_custom_call.1} parent=1 // pred_check_branch
      %237 = sbr.rel (0) target = $region117
    $region116: #{tpu_custom_call.1} parent=1 // pred_region
      %238 = dma.done [#allocation24], 64
    $region117: #{tpu_custom_call.1} parent=1 // pred_fallthru
      _
    // Predicated region
    $region118: #{tpu_custom_call.1} parent=1 // pred_check
      _
    $region119: #{tpu_custom_call.1} parent=1 // pred_check_branch
      %240 = sbr.rel (0) target = $region121
    $region120: #{tpu_custom_call.1} parent=1 // pred_region
      %241 = dma.done [#allocation24], 32
    $region121: #{tpu_custom_call.1} parent=1 // pred_fallthru
      _
    %v243 = vld [vmem:[#allocation2] sm:$0xff]
    %v244 = vld [vmem:[#allocation2 + $0x8] sm:$0xff]
    %v245 = vld [vmem:[#allocation2 + $0x10] sm:$0xff]
    %v246 = vld [vmem:[#allocation2 + $0x18] sm:$0xff]
    %v247 = vld [vmem:[#allocation5] sm:$0x7]
    %249 = vset.pattern.permute.xlu0 0
    %250 = vperm.xlu0 %249, %v243
    %v251 = vpop.permute.xlu0 %250
    %254 = vset.pattern.permute.xlu0 0
    %255 = vperm.xlu0 %254, %v244
    %v256 = vpop.permute.xlu0 %255
    %259 = vset.pattern.permute.xlu0 0
    %260 = vperm.xlu0 %259, %v245
    %v261 = vpop.permute.xlu0 %260
    %264 = vset.pattern.permute.xlu0 0
    %265 = vperm.xlu0 %264, %v246
    %v266 = vpop.permute.xlu0 %265
    %v268 = vlaneseq
    %v269 = vshrl.u32 %v268, 7
    %v270 = vsub.s32 0, %v269
    %v271 = vrot.slane %v247, %v270
    %v272 = vmul.f32 %v251, %v271
    %v273 = vmul.f32 %v256, %v271
    %v274 = vmul.f32 %v261, %v271
    %v275 = vmul.f32 %v266, %v271
    %276 = vset.pattern.permute.xlu0 1
    %277 = vperm.xlu0 %276, %v243
    %v278 = vpop.permute.xlu0 %277
    %280 = vset.pattern.permute.xlu0 1
    %281 = vperm.xlu0 %280, %v244
    %v282 = vpop.permute.xlu0 %281
    %284 = vset.pattern.permute.xlu0 1
    %285 = vperm.xlu0 %284, %v245
    %v286 = vpop.permute.xlu0 %285
    %288 = vset.pattern.permute.xlu0 1
    %289 = vperm.xlu0 %288, %v246
    %v290 = vpop.permute.xlu0 %289
    %v292 = vlaneseq
    %v293 = vshrl.u32 %v292, 7
    %v294 = vsub.s32 1, %v293
    %v295 = vrot.slane %v247, %v294
    %v296 = vmul.f32 %v278, %v295
    %v297 = vmul.f32 %v282, %v295
    %v298 = vmul.f32 %v286, %v295
    %v299 = vmul.f32 %v290, %v295
    %v300 = vadd.f32 %v272, %v296
    %v301 = vadd.f32 %v273, %v297
    %v302 = vadd.f32 %v274, %v298
    %v303 = vadd.f32 %v275, %v299
    %304 = vset.pattern.permute.xlu0 2
    %305 = vperm.xlu0 %304, %v243
    %v306 = vpop.permute.xlu0 %305
    %308 = vset.pattern.permute.xlu0 2
    %309 = vperm.xlu0 %308, %v244
    %v310 = vpop.permute.xlu0 %309
    %312 = vset.pattern.permute.xlu0 2
    %313 = vperm.xlu0 %312, %v245
    %v314 = vpop.permute.xlu0 %313
    %316 = vset.pattern.permute.xlu0 2
    %317 = vperm.xlu0 %316, %v246
    %v318 = vpop.permute.xlu0 %317
    %v320 = vlaneseq
    %v321 = vshrl.u32 %v320, 7
    %v322 = vsub.s32 2, %v321
    %v323 = vrot.slane %v247, %v322
    %v324 = vmul.f32 %v306, %v323
    %v325 = vmul.f32 %v310, %v323
    %v326 = vmul.f32 %v314, %v323
    %v327 = vmul.f32 %v318, %v323
    %v328 = vadd.f32 %v300, %v324
    %v329 = vadd.f32 %v301, %v325
    %v330 = vadd.f32 %v302, %v326
    %v331 = vadd.f32 %v303, %v327
    %v332 = vld [vmem:[#allocation22] sm:$0x1]
    %v333 = vlaneseq
    %v334 = vshrl.u32 %v333, 7
    %v335 = vsub.s32 0, %v334
    %v336 = vrot.slane %v332, %v335
    %v337 = vadd.f32 %v328, %v336
    %v338 = vadd.f32 %v329, %v336
    %v339 = vadd.f32 %v330, %v336
    %v340 = vadd.f32 %v331, %v336
    %v341 = vmax.f32 %v337, 0.0
    %v342 = vmax.f32 %v338, 0.0
    %v343 = vmax.f32 %v339, 0.0
    %v344 = vmax.f32 %v340, 0.0
    %v345 = vld [vmem:[#allocation7] sm:$0xf]
    %v346 = vld [vmem:[#allocation7 + $0x4] sm:$0xf]
    %v347 = vld [vmem:[#allocation7 + $0x8] sm:$0xf]
    %v348 = vld [vmem:[#allocation7 + $0xc] sm:$0xf]
    %v349 = vld [vmem:[#allocation7 + $0x10] sm:$0xf]
    %v350 = vld [vmem:[#allocation7 + $0x14] sm:$0xf]
    %v351 = vld [vmem:[#allocation7 + $0x18] sm:$0xf]
    %v352 = vld [vmem:[#allocation7 + $0x1c] sm:$0xf]
    %v353 = vpack.c.bf16 %v342, %v341
    %v354 = vpack.c.bf16 %v344, %v343
    %v355 = vld [vmem:[#allocation19] sm:$0x1]
    %v356 = vlaneseq
    %v357 = vshrl.u32 %v356, 7
    %v358 = vsub.s32 0, %v357
    %v359 = vrot.slane %v355, %v358
    %v368 = vunpack.c.l.b16 %v345
    %v369 = vunpack.c.l.b16 %v346
    %v370 = vunpack.c.l.b16 %v347
    %v371 = vunpack.c.l.b16 %v348
    %v372 = vunpack.c.l.b16 %v349
    %v373 = vunpack.c.l.b16 %v350
    %v374 = vunpack.c.l.b16 %v351
    %v375 = vunpack.c.l.b16 %v352
    %v376 = vpack.c.b16 %v369, %v368
    %v377 = vpack.c.b16 %v371, %v370
    %v378 = vpack.c.b16 %v373, %v372
    %v379 = vpack.c.b16 %v375, %v374
    %vm384 = vcmask 523264
    %v386 = vsel %vm384, %v353, 0
    %v389 = vsel %vm384, %v354, 0
    %391 = vmatprep.subr.bf16.mxu0 0
    %392 = vmatpush1.bf16.msra.mxu0 %v376
    %393 = vmatprep.subr.bf16.mxu0 0
    %394 = vmatpush1.bf16.msra.mxu0 %v377
    %395 = vmatprep.subr.bf16.mxu0 0
    %396 = vmatpush1.bf16.msra.mxu0 %v378
    %397 = vmatprep.subr.bf16.mxu0 0
    %398 = vmatpush1.bf16.msra.mxu0 %v379
    %399 = vmatprep.subr.bf16.mxu0 0
    %400 = vmatpush1.bf16.msra.mxu0 0
    %401 = vmatprep.subr.bf16.mxu0 0
    %402 = vmatpush1.bf16.msra.mxu0 0
    %403 = vmatprep.subr.bf16.mxu0 0
    %404 = vmatpush1.bf16.msra.mxu0 0
    %405 = vmatprep.subr.bf16.mxu0 0
    %406 = vmatpush1.bf16.msra.mxu0 0
    %407 = vmatprep.subr.bf16.mxu0 0
    %408 = vmatpush1.bf16.msra.mxu0 0
    %409 = vmatprep.subr.bf16.mxu0 0
    %410 = vmatpush1.bf16.msra.mxu0 0
    %411 = vmatprep.subr.bf16.mxu0 0
    %412 = vmatpush1.bf16.msra.mxu0 0
    %413 = vmatprep.subr.bf16.mxu0 0
    %414 = vmatpush1.bf16.msra.mxu0 0
    %415 = vmatprep.subr.bf16.mxu0 0
    %416 = vmatpush1.bf16.msra.mxu0 0
    %417 = vmatprep.subr.bf16.mxu0 0
    %418 = vmatpush1.bf16.msra.mxu0 0
    %419 = vmatprep.subr.bf16.mxu0 0
    %420 = vmatpush1.bf16.msra.mxu0 0
    %421 = vmatprep.subr.bf16.mxu0 0
    %422 = vmatpush1.bf16.msra.mxu0 0
    %423 = vmatprep.mubr.bf16.mxu0 0
    %424 = vmatmul.mubr.bf16.gmra.mrb[0].mxu0 %v386
    %v425 = vpop.f32.mrb[0].mxu0
    %v426 = vadd.f32 %v359, %v425
    %v427 = vpop.f32.mrb[0].mxu0
    %v428 = vpop.f32.mrb[0].mxu0
    %v429 = vadd.f32 %v359, %v428
    %v430 = vpop.f32.mrb[0].mxu0
    %431 = vmatprep.mubr.bf16.mxu0 0
    %432 = vmatmul.mubr.bf16.gmra.mrb[0].mxu0 %v389
    %v433 = vpop.f32.mrb[0].mxu0
    %v434 = vadd.f32 %v359, %v433
    %v435 = vpop.f32.mrb[0].mxu0
    %v436 = vpop.f32.mrb[0].mxu0
    %v437 = vadd.f32 %v359, %v436
    %v438 = vpop.f32.mrb[0].mxu0
    %439 = vdwg.mxu0
    %v440 = vld [vmem:[#allocation8] sm:$0xf]
    %v441 = vld [vmem:[#allocation8 + $0x4] sm:$0xf]
    %v442 = vld [vmem:[#allocation8 + $0x8] sm:$0xf]
    %v443 = vld [vmem:[#allocation8 + $0xc] sm:$0xf]
    %v444 = vld [vmem:[#allocation8 + $0x10] sm:$0xf]
    %v445 = vld [vmem:[#allocation8 + $0x14] sm:$0xf]
    %v446 = vld [vmem:[#allocation8 + $0x18] sm:$0xf]
    %v447 = vld [vmem:[#allocation8 + $0x1c] sm:$0xf]
    %v448 = vpack.c.bf16 %v429, %v426
    %v449 = vpack.c.bf16 %v437, %v434
    %v450 = vld [vmem:[#allocation20] sm:$0x1]
    %v451 = vlaneseq
    %v452 = vshrl.u32 %v451, 7
    %v453 = vsub.s32 0, %v452
    %v454 = vrot.slane %v450, %v453
    %v463 = vunpack.c.l.b16 %v440
    %v464 = vunpack.c.l.b16 %v441
    %v465 = vunpack.c.l.b16 %v442
    %v466 = vunpack.c.l.b16 %v443
    %v467 = vunpack.c.l.b16 %v444
    %v468 = vunpack.c.l.b16 %v445
    %v469 = vunpack.c.l.b16 %v446
    %v470 = vunpack.c.l.b16 %v447
    %v471 = vpack.c.b16 %v464, %v463
    %v472 = vpack.c.b16 %v466, %v465
    %v473 = vpack.c.b16 %v468, %v467
    %v474 = vpack.c.b16 %v470, %v469
    %v480 = vsel %vm384, %v448, 0
    %v483 = vsel %vm384, %v449, 0
    %485 = vmatprep.subr.bf16.mxu0 0
    %486 = vmatpush1.bf16.msra.mxu0 %v471
    %487 = vmatprep.subr.bf16.mxu0 0
    %488 = vmatpush1.bf16.msra.mxu0 %v472
    %489 = vmatprep.subr.bf16.mxu0 0
    %490 = vmatpush1.bf16.msra.mxu0 %v473
    %491 = vmatprep.subr.bf16.mxu0 0
    %492 = vmatpush1.bf16.msra.mxu0 %v474
    %493 = vmatprep.subr.bf16.mxu0 0
    %494 = vmatpush1.bf16.msra.mxu0 0
    %495 = vmatprep.subr.bf16.mxu0 0
    %496 = vmatpush1.bf16.msra.mxu0 0
    %497 = vmatprep.subr.bf16.mxu0 0
    %498 = vmatpush1.bf16.msra.mxu0 0
    %499 = vmatprep.subr.bf16.mxu0 0
    %500 = vmatpush1.bf16.msra.mxu0 0
    %501 = vmatprep.subr.bf16.mxu0 0
    %502 = vmatpush1.bf16.msra.mxu0 0
    %503 = vmatprep.subr.bf16.mxu0 0
    %504 = vmatpush1.bf16.msra.mxu0 0
    %505 = vmatprep.subr.bf16.mxu0 0
    %506 = vmatpush1.bf16.msra.mxu0 0
    %507 = vmatprep.subr.bf16.mxu0 0
    %508 = vmatpush1.bf16.msra.mxu0 0
    %509 = vmatprep.subr.bf16.mxu0 0
    %510 = vmatpush1.bf16.msra.mxu0 0
    %511 = vmatprep.subr.bf16.mxu0 0
    %512 = vmatpush1.bf16.msra.mxu0 0
    %513 = vmatprep.subr.bf16.mxu0 0
    %514 = vmatpush1.bf16.msra.mxu0 0
    %515 = vmatprep.subr.bf16.mxu0 0
    %516 = vmatpush1.bf16.msra.mxu0 0
    %517 = vmatprep.mubr.bf16.mxu0 0
    %518 = vmatmul.mubr.bf16.gmra.mrb[0].mxu0 %v480
    %v519 = vpop.f32.mrb[0].mxu0
    %v520 = vadd.f32 %v454, %v519
    %v521 = vpop.f32.mrb[0].mxu0
    %v522 = vpop.f32.mrb[0].mxu0
    %v523 = vadd.f32 %v454, %v522
    %v524 = vpop.f32.mrb[0].mxu0
    %525 = vmatprep.mubr.bf16.mxu0 0
    %526 = vmatmul.mubr.bf16.gmra.mrb[0].mxu0 %v483
    %v527 = vpop.f32.mrb[0].mxu0
    %v528 = vadd.f32 %v454, %v527
    %v529 = vpop.f32.mrb[0].mxu0
    %v530 = vpop.f32.mrb[0].mxu0
    %v531 = vadd.f32 %v454, %v530
    %v532 = vpop.f32.mrb[0].mxu0
    %533 = vdwg.mxu0
    %v534 = vmax.f32 %v520, 0.0
    %v535 = vmax.f32 %v523, 0.0
    %v536 = vmax.f32 %v528, 0.0
    %v537 = vmax.f32 %v531, 0.0
    %v538 = vld [vmem:[#allocation10] sm:$0xf]
    %v539 = vld [vmem:[#allocation10 + $0x4] sm:$0xf]
    %v540 = vld [vmem:[#allocation10 + $0x8] sm:$0xf]
    %v541 = vld [vmem:[#allocation10 + $0xc] sm:$0xf]
    %v542 = vld [vmem:[#allocation10 + $0x10] sm:$0xf]
    %v543 = vld [vmem:[#allocation10 + $0x14] sm:$0xf]
    %v544 = vld [vmem:[#allocation10 + $0x18] sm:$0xf]
    %v545 = vld [vmem:[#allocation10 + $0x1c] sm:$0xf]
    %v546 = vld [vmem:[#allocation10 + $0x20] sm:$0xf]
    %v547 = vld [vmem:[#allocation10 + $0x24] sm:$0xf]
    %v548 = vld [vmem:[#allocation10 + $0x28] sm:$0xf]
    %v549 = vld [vmem:[#allocation10 + $0x2c] sm:$0xf]
    %v550 = vpack.c.bf16 %v535, %v534
    %v551 = vpack.c.bf16 %v537, %v536
    %v552 = vld [vmem:[#allocation19 + $0x1] sm:$0x1]
    %v553 = vlaneseq
    %v554 = vshrl.u32 %v553, 7
    %v555 = vsub.s32 0, %v554
    %v556 = vrot.slane %v552, %v555
    %v569 = vunpack.c.l.b16 %v538
    %v570 = vunpack.c.l.b16 %v539
    %v571 = vunpack.c.l.b16 %v540
    %v572 = vunpack.c.l.b16 %v541
    %v573 = vunpack.c.l.b16 %v542
    %v574 = vunpack.c.l.b16 %v543
    %v575 = vunpack.c.l.b16 %v544
    %v576 = vunpack.c.l.b16 %v545
    %v577 = vunpack.c.l.b16 %v546
    %v578 = vunpack.c.l.b16 %v547
    %v579 = vunpack.c.l.b16 %v548
    %v580 = vunpack.c.l.b16 %v549
    %v581 = vpack.c.b16 %v570, %v569
    %v582 = vpack.c.b16 %v572, %v571
    %v583 = vpack.c.b16 %v574, %v573
    %v584 = vpack.c.b16 %v576, %v575
    %v585 = vpack.c.b16 %v578, %v577
    %v586 = vpack.c.b16 %v580, %v579
    %vm593 = vcmask 785408
    %v595 = vsel %vm593, %v550, 0
    %v598 = vsel %vm593, %v551, 0
    %600 = vmatprep.subr.bf16.mxu0 0
    %601 = vmatpush1.bf16.msra.mxu0 %v581
    %602 = vmatprep.subr.bf16.mxu0 0
    %603 = vmatpush1.bf16.msra.mxu0 %v582
    %604 = vmatprep.subr.bf16.mxu0 0
    %605 = vmatpush1.bf16.msra.mxu0 %v583
    %606 = vmatprep.subr.bf16.mxu0 0
    %607 = vmatpush1.bf16.msra.mxu0 %v584
    %608 = vmatprep.subr.bf16.mxu0 0
    %609 = vmatpush1.bf16.msra.mxu0 %v585
    %610 = vmatprep.subr.bf16.mxu0 0
    %611 = vmatpush1.bf16.msra.mxu0 %v586
    %612 = vmatprep.subr.bf16.mxu0 0
    %613 = vmatpush1.bf16.msra.mxu0 0
    %614 = vmatprep.subr.bf16.mxu0 0
    %615 = vmatpush1.bf16.msra.mxu0 0
    %616 = vmatprep.subr.bf16.mxu0 0
    %617 = vmatpush1.bf16.msra.mxu0 0
    %618 = vmatprep.subr.bf16.mxu0 0
    %619 = vmatpush1.bf16.msra.mxu0 0
    %620 = vmatprep.subr.bf16.mxu0 0
    %621 = vmatpush1.bf16.msra.mxu0 0
    %622 = vmatprep.subr.bf16.mxu0 0
    %623 = vmatpush1.bf16.msra.mxu0 0
    %624 = vmatprep.subr.bf16.mxu0 0
    %625 = vmatpush1.bf16.msra.mxu0 0
    %626 = vmatprep.subr.bf16.mxu0 0
    %627 = vmatpush1.bf16.msra.mxu0 0
    %628 = vmatprep.subr.bf16.mxu0 0
    %629 = vmatpush1.bf16.msra.mxu0 0
    %630 = vmatprep.subr.bf16.mxu0 0
    %631 = vmatpush1.bf16.msra.mxu0 0
    %632 = vmatprep.mubr.bf16.mxu0 0
    %633 = vmatmul.mubr.bf16.gmra.mrb[0].mxu0 %v595
    %v634 = vpop.f32.mrb[0].mxu0
    %v635 = vadd.f32 %v556, %v634
    %v636 = vpop.f32.mrb[0].mxu0
    %v637 = vpop.f32.mrb[0].mxu0
    %v638 = vadd.f32 %v556, %v637
    %v639 = vpop.f32.mrb[0].mxu0
    %640 = vmatprep.mubr.bf16.mxu0 0
    %641 = vmatmul.mubr.bf16.gmra.mrb[0].mxu0 %v598
    %v642 = vpop.f32.mrb[0].mxu0
    %v643 = vadd.f32 %v556, %v642
    %v644 = vpop.f32.mrb[0].mxu0
    %v645 = vpop.f32.mrb[0].mxu0
    %v646 = vadd.f32 %v556, %v645
    %v647 = vpop.f32.mrb[0].mxu0
    %648 = vdwg.mxu0
    %v649 = vmul.f32 %v635, %v426
    %v650 = vmul.f32 %v638, %v429
    %v651 = vmul.f32 %v643, %v434
    %v652 = vmul.f32 %v646, %v437
    %657 = vrot.lane.b32.xlu0 %v649, 64
    %v658 = vpop.permute.xlu0 %657
    %659 = vrot.lane.b32.xlu0 %v650, 64
    %v660 = vpop.permute.xlu0 %659
    %661 = vrot.lane.b32.xlu0 %v651, 64
    %v662 = vpop.permute.xlu0 %661
    %663 = vrot.lane.b32.xlu0 %v652, 64
    %v664 = vpop.permute.xlu0 %663
    %v669 = vadd.f32 %v426, %v658
    %v670 = vadd.f32 %v429, %v660
    %v671 = vadd.f32 %v434, %v662
    %v672 = vadd.f32 %v437, %v664
    %s673 = scalar_lea.vmem [#allocation7], 32
    %v674 = vld [vmem:[%s673] sm:$0xf]
    %v675 = vld [vmem:[%s673 + $0x4] sm:$0xf]
    %v676 = vld [vmem:[%s673 + $0x8] sm:$0xf]
    %v677 = vld [vmem:[%s673 + $0xc] sm:$0xf]
    %v678 = vld [vmem:[%s673 + $0x10] sm:$0xf]
    %v679 = vld [vmem:[%s673 + $0x14] sm:$0xf]
    %v680 = vld [vmem:[%s673 + $0x18] sm:$0xf]
    %v681 = vld [vmem:[%s673 + $0x1c] sm:$0xf]
    %v682 = vpack.c.bf16 %v638, %v635
    %v683 = vpack.c.bf16 %v646, %v643
    %v684 = vld [vmem:[#allocation19 + $0x2] sm:$0x1]
    %v685 = vlaneseq
    %v686 = vshrl.u32 %v685, 7
    %v687 = vsub.s32 0, %v686
    %v688 = vrot.slane %v684, %v687
    %v697 = vunpack.c.l.b16 %v674
    %v698 = vunpack.c.l.b16 %v675
    %v699 = vunpack.c.l.b16 %v676
    %v700 = vunpack.c.l.b16 %v677
    %v701 = vunpack.c.l.b16 %v678
    %v702 = vunpack.c.l.b16 %v679
    %v703 = vunpack.c.l.b16 %v680
    %v704 = vunpack.c.l.b16 %v681
    %v705 = vpack.c.b16 %v698, %v697
    %v706 = vpack.c.b16 %v700, %v699
    %v707 = vpack.c.b16 %v702, %v701
    %v708 = vpack.c.b16 %v704, %v703
    %v714 = vsel %vm384, %v682, 0
    %v717 = vsel %vm384, %v683, 0
    %719 = vmatprep.subr.bf16.mxu0 0
    %720 = vmatpush1.bf16.msra.mxu0 %v705
    %721 = vmatprep.subr.bf16.mxu0 0
    %722 = vmatpush1.bf16.msra.mxu0 %v706
    %723 = vmatprep.subr.bf16.mxu0 0
    %724 = vmatpush1.bf16.msra.mxu0 %v707
    %725 = vmatprep.subr.bf16.mxu0 0
    %726 = vmatpush1.bf16.msra.mxu0 %v708
    %727 = vmatprep.subr.bf16.mxu0 0
    %728 = vmatpush1.bf16.msra.mxu0 0
    %729 = vmatprep.subr.bf16.mxu0 0
    %730 = vmatpush1.bf16.msra.mxu0 0
    %731 = vmatprep.subr.bf16.mxu0 0
    %732 = vmatpush1.bf16.msra.mxu0 0
    %733 = vmatprep.subr.bf16.mxu0 0
    %734 = vmatpush1.bf16.msra.mxu0 0
    %735 = vmatprep.subr.bf16.mxu0 0
    %736 = vmatpush1.bf16.msra.mxu0 0
    %737 = vmatprep.subr.bf16.mxu0 0
    %738 = vmatpush1.bf16.msra.mxu0 0
    %739 = vmatprep.subr.bf16.mxu0 0
    %740 = vmatpush1.bf16.msra.mxu0 0
    %741 = vmatprep.subr.bf16.mxu0 0
    %742 = vmatpush1.bf16.msra.mxu0 0
    %743 = vmatprep.subr.bf16.mxu0 0
    %744 = vmatpush1.bf16.msra.mxu0 0
    %745 = vmatprep.subr.bf16.mxu0 0
    %746 = vmatpush1.bf16.msra.mxu0 0
    %747 = vmatprep.subr.bf16.mxu0 0
    %748 = vmatpush1.bf16.msra.mxu0 0
    %749 = vmatprep.subr.bf16.mxu0 0
    %750 = vmatpush1.bf16.msra.mxu0 0
    %751 = vmatprep.mubr.bf16.mxu0 0
    %752 = vmatmul.mubr.bf16.gmra.mrb[0].mxu0 %v714
    %v753 = vpop.f32.mrb[0].mxu0
    %v754 = vadd.f32 %v688, %v753
    %v755 = vpop.f32.mrb[0].mxu0
    %v756 = vpop.f32.mrb[0].mxu0
    %v757 = vadd.f32 %v688, %v756
    %v758 = vpop.f32.mrb[0].mxu0
    %759 = vmatprep.mubr.bf16.mxu0 0
    %760 = vmatmul.mubr.bf16.gmra.mrb[0].mxu0 %v717
    %v761 = vpop.f32.mrb[0].mxu0
    %v762 = vadd.f32 %v688, %v761
    %v763 = vpop.f32.mrb[0].mxu0
    %v764 = vpop.f32.mrb[0].mxu0
    %v765 = vadd.f32 %v688, %v764
    %v766 = vpop.f32.mrb[0].mxu0
    %767 = vdwg.mxu0
    %s768 = scalar_lea.vmem [#allocation7], 64
    %v769 = vld [vmem:[%s768] sm:$0xf]
    %v770 = vld [vmem:[%s768 + $0x4] sm:$0xf]
    %v771 = vld [vmem:[%s768 + $0x8] sm:$0xf]
    %v772 = vld [vmem:[%s768 + $0xc] sm:$0xf]
    %v773 = vld [vmem:[%s768 + $0x10] sm:$0xf]
    %v774 = vld [vmem:[%s768 + $0x14] sm:$0xf]
    %v775 = vld [vmem:[%s768 + $0x18] sm:$0xf]
    %v776 = vld [vmem:[%s768 + $0x1c] sm:$0xf]
    %v777 = vpack.c.bf16 %v670, %v669
    %v778 = vpack.c.bf16 %v672, %v671
    %v779 = vld [vmem:[#allocation19 + $0x3] sm:$0x1]
    %v780 = vlaneseq
    %v781 = vshrl.u32 %v780, 7
    %v782 = vsub.s32 0, %v781
    %v783 = vrot.slane %v779, %v782
    %v792 = vunpack.c.l.b16 %v769
    %v793 = vunpack.c.l.b16 %v770
    %v794 = vunpack.c.l.b16 %v771
    %v795 = vunpack.c.l.b16 %v772
    %v796 = vunpack.c.l.b16 %v773
    %v797 = vunpack.c.l.b16 %v774
    %v798 = vunpack.c.l.b16 %v775
    %v799 = vunpack.c.l.b16 %v776
    %v800 = vpack.c.b16 %v793, %v792
    %v801 = vpack.c.b16 %v795, %v794
    %v802 = vpack.c.b16 %v797, %v796
    %v803 = vpack.c.b16 %v799, %v798
    %v809 = vsel %vm384, %v777, 0
    %v812 = vsel %vm384, %v778, 0
    %814 = vmatprep.subr.bf16.mxu0 0
    %815 = vmatpush1.bf16.msra.mxu0 %v800
    %816 = vmatprep.subr.bf16.mxu0 0
    %817 = vmatpush1.bf16.msra.mxu0 %v801
    %818 = vmatprep.subr.bf16.mxu0 0
    %819 = vmatpush1.bf16.msra.mxu0 %v802
    %820 = vmatprep.subr.bf16.mxu0 0
    %821 = vmatpush1.bf16.msra.mxu0 %v803
    %822 = vmatprep.subr.bf16.mxu0 0
    %823 = vmatpush1.bf16.msra.mxu0 0
    %824 = vmatprep.subr.bf16.mxu0 0
    %825 = vmatpush1.bf16.msra.mxu0 0
    %826 = vmatprep.subr.bf16.mxu0 0
    %827 = vmatpush1.bf16.msra.mxu0 0
    %828 = vmatprep.subr.bf16.mxu0 0
    %829 = vmatpush1.bf16.msra.mxu0 0
    %830 = vmatprep.subr.bf16.mxu0 0
    %831 = vmatpush1.bf16.msra.mxu0 0
    %832 = vmatprep.subr.bf16.mxu0 0
    %833 = vmatpush1.bf16.msra.mxu0 0
    %834 = vmatprep.subr.bf16.mxu0 0
    %835 = vmatpush1.bf16.msra.mxu0 0
    %836 = vmatprep.subr.bf16.mxu0 0
    %837 = vmatpush1.bf16.msra.mxu0 0
    %838 = vmatprep.subr.bf16.mxu0 0
    %839 = vmatpush1.bf16.msra.mxu0 0
    %840 = vmatprep.subr.bf16.mxu0 0
    %841 = vmatpush1.bf16.msra.mxu0 0
    %842 = vmatprep.subr.bf16.mxu0 0
    %843 = vmatpush1.bf16.msra.mxu0 0
    %844 = vmatprep.subr.bf16.mxu0 0
    %845 = vmatpush1.bf16.msra.mxu0 0
    %846 = vmatprep.mubr.bf16.mxu0 0
    %847 = vmatmul.mubr.bf16.gmra.mrb[0].mxu0 %v809
    %v848 = vpop.f32.mrb[0].mxu0
    %v849 = vadd.f32 %v783, %v848
    %v850 = vpop.f32.mrb[0].mxu0
    %v851 = vpop.f32.mrb[0].mxu0
    %v852 = vadd.f32 %v783, %v851
    %v853 = vpop.f32.mrb[0].mxu0
    %854 = vmatprep.mubr.bf16.mxu0 0
    %855 = vmatmul.mubr.bf16.gmra.mrb[0].mxu0 %v812
    %v856 = vpop.f32.mrb[0].mxu0
    %v857 = vadd.f32 %v783, %v856
    %v858 = vpop.f32.mrb[0].mxu0
    %v859 = vpop.f32.mrb[0].mxu0
    %v860 = vadd.f32 %v783, %v859
    %v861 = vpop.f32.mrb[0].mxu0
    %862 = vdwg.mxu0
    %v863 = vmax.f32 %v754, 0.0
    %v864 = vmax.f32 %v757, 0.0
    %v865 = vmax.f32 %v762, 0.0
    %v866 = vmax.f32 %v765, 0.0
    %v867 = vld [vmem:[#allocation13] sm:$0xf]
    %v868 = vld [vmem:[#allocation13 + $0x4] sm:$0xf]
    %v869 = vld [vmem:[#allocation13 + $0x8] sm:$0xf]
    %v870 = vld [vmem:[#allocation13 + $0xc] sm:$0xf]
    %v871 = vld [vmem:[#allocation13 + $0x10] sm:$0xf]
    %v872 = vld [vmem:[#allocation13 + $0x14] sm:$0xf]
    %v873 = vld [vmem:[#allocation13 + $0x18] sm:$0xf]
    %v874 = vld [vmem:[#allocation13 + $0x1c] sm:$0xf]
    %v875 = vpack.c.bf16 %v864, %v863
    %v876 = vpack.c.bf16 %v866, %v865
    %v877 = vld [vmem:[#allocation22 + $0x1] sm:$0x1]
    %v878 = vlaneseq
    %v879 = vshrl.u32 %v878, 7
    %v880 = vsub.s32 0, %v879
    %v881 = vrot.slane %v877, %v880
    %v890 = vunpack.c.l.b16 %v867
    %v891 = vunpack.c.l.b16 %v868
    %v892 = vunpack.c.l.b16 %v869
    %v893 = vunpack.c.l.b16 %v870
    %v894 = vunpack.c.l.b16 %v871
    %v895 = vunpack.c.l.b16 %v872
    %v896 = vunpack.c.l.b16 %v873
    %v897 = vunpack.c.l.b16 %v874
    %v898 = vpack.c.b16 %v891, %v890
    %v899 = vpack.c.b16 %v893, %v892
    %v900 = vpack.c.b16 %v895, %v894
    %v901 = vpack.c.b16 %v897, %v896
    %v907 = vsel %vm384, %v875, 0
    %v910 = vsel %vm384, %v876, 0
    %912 = vmatprep.subr.bf16.mxu0 0
    %913 = vmatpush1.bf16.msra.mxu0 %v898
    %914 = vmatprep.subr.bf16.mxu0 0
    %915 = vmatpush1.bf16.msra.mxu0 %v899
    %916 = vmatprep.subr.bf16.mxu0 0
    %917 = vmatpush1.bf16.msra.mxu0 %v900
    %918 = vmatprep.subr.bf16.mxu0 0
    %919 = vmatpush1.bf16.msra.mxu0 %v901
    %920 = vmatprep.subr.bf16.mxu0 0
    %921 = vmatpush1.bf16.msra.mxu0 0
    %922 = vmatprep.subr.bf16.mxu0 0
    %923 = vmatpush1.bf16.msra.mxu0 0
    %924 = vmatprep.subr.bf16.mxu0 0
    %925 = vmatpush1.bf16.msra.mxu0 0
    %926 = vmatprep.subr.bf16.mxu0 0
    %927 = vmatpush1.bf16.msra.mxu0 0
    %928 = vmatprep.subr.bf16.mxu0 0
    %929 = vmatpush1.bf16.msra.mxu0 0
    %930 = vmatprep.subr.bf16.mxu0 0
    %931 = vmatpush1.bf16.msra.mxu0 0
    %932 = vmatprep.subr.bf16.mxu0 0
    %933 = vmatpush1.bf16.msra.mxu0 0
    %934 = vmatprep.subr.bf16.mxu0 0
    %935 = vmatpush1.bf16.msra.mxu0 0
    %936 = vmatprep.subr.bf16.mxu0 0
    %937 = vmatpush1.bf16.msra.mxu0 0
    %938 = vmatprep.subr.bf16.mxu0 0
    %939 = vmatpush1.bf16.msra.mxu0 0
    %940 = vmatprep.subr.bf16.mxu0 0
    %941 = vmatpush1.bf16.msra.mxu0 0
    %942 = vmatprep.subr.bf16.mxu0 0
    %943 = vmatpush1.bf16.msra.mxu0 0
    %944 = vmatprep.mubr.bf16.mxu0 0
    %945 = vmatmul.mubr.bf16.gmra.mrb[0].mxu0 %v907
    %v946 = vpop.f32.mrb[0].mxu0
    %v947 = vadd.f32 %v881, %v946
    %v948 = vpop.f32.mrb[0].mxu0
    %v949 = vpop.f32.mrb[0].mxu0
    %v950 = vadd.f32 %v881, %v949
    %v951 = vpop.f32.mrb[0].mxu0
    %952 = vmatprep.mubr.bf16.mxu0 0
    %953 = vmatmul.mubr.bf16.gmra.mrb[0].mxu0 %v910
    %v954 = vpop.f32.mrb[0].mxu0
    %v955 = vadd.f32 %v881, %v954
    %v956 = vpop.f32.mrb[0].mxu0
    %v957 = vpop.f32.mrb[0].mxu0
    %v958 = vadd.f32 %v881, %v957
    %v959 = vpop.f32.mrb[0].mxu0
    %960 = vdwg.mxu0
    %v961 = vxor.u32 %v947, 2147483648
    %v962 = vxor.u32 %v950, 2147483648
    %v963 = vxor.u32 %v955, 2147483648
    %v964 = vxor.u32 %v958, 2147483648
    %v965 = vmul.f32 %v961, 1.442695
    %v966 = vpow.pop %v965
    %v967 = vmul.f32 %v962, 1.442695
    %v968 = vpow.pop %v967
    %v969 = vmul.f32 %v963, 1.442695
    %v970 = vpow.pop %v969
    %v971 = vmul.f32 %v964, 1.442695
    %v972 = vpow.pop %v971
    %v973 = vadd.f32 %v966, 1.0
    %v974 = vadd.f32 %v968, 1.0
    %v975 = vadd.f32 %v970, 1.0
    %v976 = vadd.f32 %v972, 1.0
    %v977 = vrcp.pop %v973
    %v978 = vmul.f32 1.0, %v977
    %v979 = vrcp.pop %v974
    %v980 = vmul.f32 1.0, %v979
    %v981 = vrcp.pop %v975
    %v982 = vmul.f32 1.0, %v981
    %v983 = vrcp.pop %v976
    %v984 = vmul.f32 1.0, %v983
    %v985 = vmax.f32 %v849, 0.0
    %v986 = vmax.f32 %v852, 0.0
    %v987 = vmax.f32 %v857, 0.0
    %v988 = vmax.f32 %v860, 0.0
    %s989 = scalar_lea.vmem [#allocation13], 32
    %v990 = vld [vmem:[%s989] sm:$0xf]
    %v991 = vld [vmem:[%s989 + $0x4] sm:$0xf]
    %v992 = vld [vmem:[%s989 + $0x8] sm:$0xf]
    %v993 = vld [vmem:[%s989 + $0xc] sm:$0xf]
    %v994 = vld [vmem:[%s989 + $0x10] sm:$0xf]
    %v995 = vld [vmem:[%s989 + $0x14] sm:$0xf]
    %v996 = vld [vmem:[%s989 + $0x18] sm:$0xf]
    %v997 = vld [vmem:[%s989 + $0x1c] sm:$0xf]
    %v998 = vpack.c.bf16 %v986, %v985
    %v999 = vpack.c.bf16 %v988, %v987
    %v1000 = vld [vmem:[#allocation22 + $0x2] sm:$0x1]
    %v1001 = vlaneseq
    %v1002 = vshrl.u32 %v1001, 7
    %v1003 = vsub.s32 0, %v1002
    %v1004 = vrot.slane %v1000, %v1003
    %v1013 = vunpack.c.l.b16 %v990
    %v1014 = vunpack.c.l.b16 %v991
    %v1015 = vunpack.c.l.b16 %v992
    %v1016 = vunpack.c.l.b16 %v993
    %v1017 = vunpack.c.l.b16 %v994
    %v1018 = vunpack.c.l.b16 %v995
    %v1019 = vunpack.c.l.b16 %v996
    %v1020 = vunpack.c.l.b16 %v997
    %v1021 = vpack.c.b16 %v1014, %v1013
    %v1022 = vpack.c.b16 %v1016, %v1015
    %v1023 = vpack.c.b16 %v1018, %v1017
    %v1024 = vpack.c.b16 %v1020, %v1019
    %v1030 = vsel %vm384, %v998, 0
    %v1033 = vsel %vm384, %v999, 0
    %1035 = vmatprep.subr.bf16.mxu0 0
    %1036 = vmatpush1.bf16.msra.mxu0 %v1021
    %1037 = vmatprep.subr.bf16.mxu0 0
    %1038 = vmatpush1.bf16.msra.mxu0 %v1022
    %1039 = vmatprep.subr.bf16.mxu0 0
    %1040 = vmatpush1.bf16.msra.mxu0 %v1023
    %1041 = vmatprep.subr.bf16.mxu0 0
    %1042 = vmatpush1.bf16.msra.mxu0 %v1024
    %1043 = vmatprep.subr.bf16.mxu0 0
    %1044 = vmatpush1.bf16.msra.mxu0 0
    %1045 = vmatprep.subr.bf16.mxu0 0
    %1046 = vmatpush1.bf16.msra.mxu0 0
    %1047 = vmatprep.subr.bf16.mxu0 0
    %1048 = vmatpush1.bf16.msra.mxu0 0
    %1049 = vmatprep.subr.bf16.mxu0 0
    %1050 = vmatpush1.bf16.msra.mxu0 0
    %1051 = vmatprep.subr.bf16.mxu0 0
    %1052 = vmatpush1.bf16.msra.mxu0 0
    %1053 = vmatprep.subr.bf16.mxu0 0
    %1054 = vmatpush1.bf16.msra.mxu0 0
    %1055 = vmatprep.subr.bf16.mxu0 0
    %1056 = vmatpush1.bf16.msra.mxu0 0
    %1057 = vmatprep.subr.bf16.mxu0 0
    %1058 = vmatpush1.bf16.msra.mxu0 0
    %1059 = vmatprep.subr.bf16.mxu0 0
    %1060 = vmatpush1.bf16.msra.mxu0 0
    %1061 = vmatprep.subr.bf16.mxu0 0
    %1062 = vmatpush1.bf16.msra.mxu0 0
    %1063 = vmatprep.subr.bf16.mxu0 0
    %1064 = vmatpush1.bf16.msra.mxu0 0
    %1065 = vmatprep.subr.bf16.mxu0 0
    %1066 = vmatpush1.bf16.msra.mxu0 0
    %1067 = vmatprep.mubr.bf16.mxu0 0
    %1068 = vmatmul.mubr.bf16.gmra.mrb[0].mxu0 %v1030
    %v1069 = vpop.f32.mrb[0].mxu0
    %v1070 = vadd.f32 %v1004, %v1069
    %v1071 = vpop.f32.mrb[0].mxu0
    %v1072 = vpop.f32.mrb[0].mxu0
    %v1073 = vadd.f32 %v1004, %v1072
    %v1074 = vpop.f32.mrb[0].mxu0
    %1075 = vmatprep.mubr.bf16.mxu0 0
    %1076 = vmatmul.mubr.bf16.gmra.mrb[0].mxu0 %v1033
    %v1077 = vpop.f32.mrb[0].mxu0
    %v1078 = vadd.f32 %v1004, %v1077
    %v1079 = vpop.f32.mrb[0].mxu0
    %v1080 = vpop.f32.mrb[0].mxu0
    %v1081 = vadd.f32 %v1004, %v1080
    %v1082 = vpop.f32.mrb[0].mxu0
    %1083 = vdwg.mxu0
    %s1084 = scalar_lea.vmem [#allocation13], 64
    %v1085 = vld [vmem:[%s1084] sm:$0xf]
    %v1086 = vld [vmem:[%s1084 + $0x4] sm:$0xf]
    %v1087 = vld [vmem:[%s1084 + $0x8] sm:$0xf]
    %v1088 = vld [vmem:[%s1084 + $0xc] sm:$0xf]
    %v1089 = vld [vmem:[%s1084 + $0x10] sm:$0xf]
    %v1090 = vld [vmem:[%s1084 + $0x14] sm:$0xf]
    %v1091 = vld [vmem:[%s1084 + $0x18] sm:$0xf]
    %v1092 = vld [vmem:[%s1084 + $0x1c] sm:$0xf]
    %v1093 = vpack.c.bf16 %v1073, %v1070
    %v1094 = vpack.c.bf16 %v1081, %v1078
    %v1103 = vunpack.c.l.b16 %v1085
    %v1104 = vunpack.c.l.b16 %v1086
    %v1105 = vunpack.c.l.b16 %v1087
    %v1106 = vunpack.c.l.b16 %v1088
    %v1107 = vunpack.c.l.b16 %v1089
    %v1108 = vunpack.c.l.b16 %v1090
    %v1109 = vunpack.c.l.b16 %v1091
    %v1110 = vunpack.c.l.b16 %v1092
    %v1111 = vpack.c.b16 %v1104, %v1103
    %v1112 = vpack.c.b16 %v1106, %v1105
    %v1113 = vpack.c.b16 %v1108, %v1107
    %v1114 = vpack.c.b16 %v1110, %v1109
    %v1120 = vsel %vm384, %v1093, 0
    %v1123 = vsel %vm384, %v1094, 0
    %1125 = vmatprep.subr.bf16.mxu0 0
    %1126 = vmatpush1.bf16.msra.mxu0 %v1111
    %1127 = vmatprep.subr.bf16.mxu0 0
    %1128 = vmatpush1.bf16.msra.mxu0 %v1112
    %1129 = vmatprep.subr.bf16.mxu0 0
    %1130 = vmatpush1.bf16.msra.mxu0 %v1113
    %1131 = vmatprep.subr.bf16.mxu0 0
    %1132 = vmatpush1.bf16.msra.mxu0 %v1114
    %1133 = vmatprep.subr.bf16.mxu0 0
    %1134 = vmatpush1.bf16.msra.mxu0 0
    %1135 = vmatprep.subr.bf16.mxu0 0
    %1136 = vmatpush1.bf16.msra.mxu0 0
    %1137 = vmatprep.subr.bf16.mxu0 0
    %1138 = vmatpush1.bf16.msra.mxu0 0
    %1139 = vmatprep.subr.bf16.mxu0 0
    %1140 = vmatpush1.bf16.msra.mxu0 0
    %1141 = vmatprep.subr.bf16.mxu0 0
    %1142 = vmatpush1.bf16.msra.mxu0 0
    %1143 = vmatprep.subr.bf16.mxu0 0
    %1144 = vmatpush1.bf16.msra.mxu0 0
    %1145 = vmatprep.subr.bf16.mxu0 0
    %1146 = vmatpush1.bf16.msra.mxu0 0
    %1147 = vmatprep.subr.bf16.mxu0 0
    %1148 = vmatpush1.bf16.msra.mxu0 0
    %1149 = vmatprep.subr.bf16.mxu0 0
    %1150 = vmatpush1.bf16.msra.mxu0 0
    %1151 = vmatprep.subr.bf16.mxu0 0
    %1152 = vmatpush1.bf16.msra.mxu0 0
    %1153 = vmatprep.subr.bf16.mxu0 0
    %1154 = vmatpush1.bf16.msra.mxu0 0
    %1155 = vmatprep.subr.bf16.mxu0 0
    %1156 = vmatpush1.bf16.msra.mxu0 0
    %1157 = vmatprep.mubr.bf16.mxu0 0
    %1158 = vmatmul.mubr.bf16.gmra.mrb[0].mxu0 %v1120
    %v1159 = vpop.f32.mrb[0].mxu0
    %v1160 = vadd.f32 0.0, %v1159
    %v1161 = vpop.f32.mrb[0].mxu0
    %v1162 = vpop.f32.mrb[0].mxu0
    %v1163 = vadd.f32 0.0, %v1162
    %v1164 = vpop.f32.mrb[0].mxu0
    %1165 = vmatprep.mubr.bf16.mxu0 0
    %1166 = vmatmul.mubr.bf16.gmra.mrb[0].mxu0 %v1123
    %v1167 = vpop.f32.mrb[0].mxu0
    %v1168 = vadd.f32 0.0, %v1167
    %v1169 = vpop.f32.mrb[0].mxu0
    %v1170 = vpop.f32.mrb[0].mxu0
    %v1171 = vadd.f32 0.0, %v1170
    %v1172 = vpop.f32.mrb[0].mxu0
    %1173 = vdwg.mxu0
    %1178 = vrot.lane.b32.xlu0 %v1160, 64
    %v1179 = vpop.permute.xlu0 %1178
    %1180 = vrot.lane.b32.xlu0 %v1163, 64
    %v1181 = vpop.permute.xlu0 %1180
    %1182 = vrot.lane.b32.xlu0 %v1168, 64
    %v1183 = vpop.permute.xlu0 %1182
    %1184 = vrot.lane.b32.xlu0 %v1171, 64
    %v1185 = vpop.permute.xlu0 %1184
    %v1190 = vadd.f32 %v754, %v1179
    %v1191 = vadd.f32 %v757, %v1181
    %v1192 = vadd.f32 %v762, %v1183
    %v1193 = vadd.f32 %v765, %v1185
    %v1194 = vxor.u32 %v1190, 2147483648
    %v1195 = vxor.u32 %v1191, 2147483648
    %v1196 = vxor.u32 %v1192, 2147483648
    %v1197 = vxor.u32 %v1193, 2147483648
    %v1198 = vmul.f32 %v1194, 1.442695
    %v1199 = vpow.pop %v1198
    %v1200 = vmul.f32 %v1195, 1.442695
    %v1201 = vpow.pop %v1200
    %v1202 = vmul.f32 %v1196, 1.442695
    %v1203 = vpow.pop %v1202
    %v1204 = vmul.f32 %v1197, 1.442695
    %v1205 = vpow.pop %v1204
    %v1206 = vadd.f32 %v1199, 1.0
    %v1207 = vadd.f32 %v1201, 1.0
    %v1208 = vadd.f32 %v1203, 1.0
    %v1209 = vadd.f32 %v1205, 1.0
    %v1210 = vrcp.pop %v1206
    %v1211 = vmul.f32 1.0, %v1210
    %v1212 = vrcp.pop %v1207
    %v1213 = vmul.f32 1.0, %v1212
    %v1214 = vrcp.pop %v1208
    %v1215 = vmul.f32 1.0, %v1214
    %v1216 = vrcp.pop %v1209
    %v1217 = vmul.f32 1.0, %v1216
    %v1218 = vmul.f32 %v635, %v978
    %v1219 = vmul.f32 %v638, %v980
    %v1220 = vmul.f32 %v643, %v982
    %v1221 = vmul.f32 %v646, %v984
    %1226 = vrot.lane.b32.xlu0 %v1211, 64
    %v1227 = vpop.permute.xlu0 %1226
    %1228 = vrot.lane.b32.xlu0 %v1213, 64
    %v1229 = vpop.permute.xlu0 %1228
    %1230 = vrot.lane.b32.xlu0 %v1215, 64
    %v1231 = vpop.permute.xlu0 %1230
    %1232 = vrot.lane.b32.xlu0 %v1217, 64
    %v1233 = vpop.permute.xlu0 %1232
    %v1238 = vmul.f32 %v1218, %v1227
    %v1239 = vmul.f32 %v1219, %v1229
    %v1240 = vmul.f32 %v1220, %v1231
    %v1241 = vmul.f32 %v1221, %v1233
    %v1242 = vsub.f32 1.0, %v1211
    %v1243 = vsub.f32 1.0, %v1213
    %v1244 = vsub.f32 1.0, %v1215
    %v1245 = vsub.f32 1.0, %v1217
    %1250 = vrot.lane.b32.xlu0 %v1242, 64
    %v1251 = vpop.permute.xlu0 %1250
    %1252 = vrot.lane.b32.xlu0 %v1243, 64
    %v1253 = vpop.permute.xlu0 %1252
    %1254 = vrot.lane.b32.xlu0 %v1244, 64
    %v1255 = vpop.permute.xlu0 %1254
    %1256 = vrot.lane.b32.xlu0 %v1245, 64
    %v1257 = vpop.permute.xlu0 %1256
    %v1262 = vmul.f32 %v1070, %v1251
    %v1263 = vmul.f32 %v1073, %v1253
    %v1264 = vmul.f32 %v1078, %v1255
    %v1265 = vmul.f32 %v1081, %v1257
    %v1266 = vadd.f32 %v1238, %v1262
    %v1267 = vadd.f32 %v1239, %v1263
    %v1268 = vadd.f32 %v1240, %v1264
    %v1269 = vadd.f32 %v1241, %v1265
    %vm1270 = vcmask 23552
    %v1271 = vsel %vm1270, %v243, 0.0
    %1272 = vadd.xlane.f32.xlu0 %v1271
    %v1273 = vpop.xlane.xlu0 %1272
    %v1274 = vsel %vm1270, %v244, 0.0
    %1275 = vadd.xlane.f32.xlu0 %v1274
    %v1276 = vpop.xlane.xlu0 %1275
    %v1277 = vsel %vm1270, %v245, 0.0
    %1278 = vadd.xlane.f32.xlu0 %v1277
    %v1279 = vpop.xlane.xlu0 %1278
    %v1280 = vsel %vm1270, %v246, 0.0
    %1281 = vadd.xlane.f32.xlu0 %v1280
    %v1282 = vpop.xlane.xlu0 %1281
    %s1283 = scalar_lea.vmem [#allocation8], 32
    %v1284 = vld [vmem:[%s1283] sm:$0xf]
    %v1285 = vld [vmem:[%s1283 + $0x4] sm:$0xf]
    %v1286 = vld [vmem:[%s1283 + $0x8] sm:$0xf]
    %v1287 = vld [vmem:[%s1283 + $0xc] sm:$0xf]
    %v1288 = vld [vmem:[%s1283 + $0x10] sm:$0xf]
    %v1289 = vld [vmem:[%s1283 + $0x14] sm:$0xf]
    %v1290 = vld [vmem:[%s1283 + $0x18] sm:$0xf]
    %v1291 = vld [vmem:[%s1283 + $0x1c] sm:$0xf]
    %v1292 = vpack.c.bf16 %v1267, %v1266
    %v1293 = vpack.c.bf16 %v1269, %v1268
    %v1294 = vld [vmem:[#allocation20 + $0x1] sm:$0x1]
    %v1295 = vlaneseq
    %v1296 = vshrl.u32 %v1295, 7
    %v1297 = vsub.s32 0, %v1296
    %v1298 = vrot.slane %v1294, %v1297
    %v1307 = vunpack.c.l.b16 %v1284
    %v1308 = vunpack.c.l.b16 %v1285
    %v1309 = vunpack.c.l.b16 %v1286
    %v1310 = vunpack.c.l.b16 %v1287
    %v1311 = vunpack.c.l.b16 %v1288
    %v1312 = vunpack.c.l.b16 %v1289
    %v1313 = vunpack.c.l.b16 %v1290
    %v1314 = vunpack.c.l.b16 %v1291
    %v1315 = vpack.c.b16 %v1308, %v1307
    %v1316 = vpack.c.b16 %v1310, %v1309
    %v1317 = vpack.c.b16 %v1312, %v1311
    %v1318 = vpack.c.b16 %v1314, %v1313
    %v1324 = vsel %vm384, %v1292, 0
    %v1327 = vsel %vm384, %v1293, 0
    %1329 = vmatprep.subr.bf16.mxu0 0
    %1330 = vmatpush1.bf16.msra.mxu0 %v1315
    %1331 = vmatprep.subr.bf16.mxu0 0
    %1332 = vmatpush1.bf16.msra.mxu0 %v1316
    %1333 = vmatprep.subr.bf16.mxu0 0
    %1334 = vmatpush1.bf16.msra.mxu0 %v1317
    %1335 = vmatprep.subr.bf16.mxu0 0
    %1336 = vmatpush1.bf16.msra.mxu0 %v1318
    %1337 = vmatprep.subr.bf16.mxu0 0
    %1338 = vmatpush1.bf16.msra.mxu0 0
    %1339 = vmatprep.subr.bf16.mxu0 0
    %1340 = vmatpush1.bf16.msra.mxu0 0
    %1341 = vmatprep.subr.bf16.mxu0 0
    %1342 = vmatpush1.bf16.msra.mxu0 0
    %1343 = vmatprep.subr.bf16.mxu0 0
    %1344 = vmatpush1.bf16.msra.mxu0 0
    %1345 = vmatprep.subr.bf16.mxu0 0
    %1346 = vmatpush1.bf16.msra.mxu0 0
    %1347 = vmatprep.subr.bf16.mxu0 0
    %1348 = vmatpush1.bf16.msra.mxu0 0
    %1349 = vmatprep.subr.bf16.mxu0 0
    %1350 = vmatpush1.bf16.msra.mxu0 0
    %1351 = vmatprep.subr.bf16.mxu0 0
    %1352 = vmatpush1.bf16.msra.mxu0 0
    %1353 = vmatprep.subr.bf16.mxu0 0
    %1354 = vmatpush1.bf16.msra.mxu0 0
    %1355 = vmatprep.subr.bf16.mxu0 0
    %1356 = vmatpush1.bf16.msra.mxu0 0
    %1357 = vmatprep.subr.bf16.mxu0 0
    %1358 = vmatpush1.bf16.msra.mxu0 0
    %1359 = vmatprep.subr.bf16.mxu0 0
    %1360 = vmatpush1.bf16.msra.mxu0 0
    %1361 = vmatprep.mubr.bf16.mxu0 0
    %1362 = vmatmul.mubr.bf16.gmra.mrb[0].mxu0 %v1324
    %v1363 = vpop.f32.mrb[0].mxu0
    %v1364 = vadd.f32 %v1298, %v1363
    %v1365 = vpop.f32.mrb[0].mxu0
    %v1366 = vpop.f32.mrb[0].mxu0
    %v1367 = vadd.f32 %v1298, %v1366
    %v1368 = vpop.f32.mrb[0].mxu0
    %1369 = vmatprep.mubr.bf16.mxu0 0
    %1370 = vmatmul.mubr.bf16.gmra.mrb[0].mxu0 %v1327
    %v1371 = vpop.f32.mrb[0].mxu0
    %v1372 = vadd.f32 %v1298, %v1371
    %v1373 = vpop.f32.mrb[0].mxu0
    %v1374 = vpop.f32.mrb[0].mxu0
    %v1375 = vadd.f32 %v1298, %v1374
    %v1376 = vpop.f32.mrb[0].mxu0
    %1377 = vdwg.mxu0
    %v1378 = vmax.f32 %v1364, 0.0
    %v1379 = vmax.f32 %v1367, 0.0
    %v1380 = vmax.f32 %v1372, 0.0
    %v1381 = vmax.f32 %v1375, 0.0
    %v1382 = vld [vmem:[#allocation11] sm:$0xff]
    %v1383 = vld [vmem:[#allocation11 + $0x8] sm:$0xff]
    %v1384 = vld [vmem:[#allocation11 + $0x10] sm:$0xff]
    %v1385 = vld [vmem:[#allocation11 + $0x18] sm:$0xff]
    %v1386 = vld [vmem:[#allocation11 + $0x20] sm:$0xff]
    %v1387 = vld [vmem:[#allocation11 + $0x28] sm:$0xff]
    %v1388 = vld [vmem:[#allocation11 + $0x30] sm:$0xff]
    %v1389 = vld [vmem:[#allocation11 + $0x38] sm:$0xff]
    %v1390 = vld [vmem:[#allocation11 + $0x40] sm:$0xff]
    %v1391 = vld [vmem:[#allocation11 + $0x48] sm:$0xff]
    %v1392 = vld [vmem:[#allocation11 + $0x50] sm:$0xff]
    %v1393 = vld [vmem:[#allocation11 + $0x58] sm:$0xff]
    %v1394 = vpack.c.bf16 %v1379, %v1378
    %v1395 = vpack.c.bf16 %v1381, %v1380
    %v1396 = vld [vmem:[#allocation23] ss:$2 sm:$0x3]
    %v1398 = vlaneseq
    %v1399 = vshrl.u32 %v1398, 7
    %v1400 = vsub.s32 0, %v1399
    %v1401 = vrot.slane %v1396, %v1400
    %v1402 = vlaneseq
    %v1403 = vshrl.u32 %v1402, 7
    %v1404 = vsub.s32 1, %v1403
    %v1405 = vrot.slane %v1396, %v1404
    %v1420 = vunpack.c.l.b16 %v1382
    %v1421 = vunpack.c.h.b16 %v1382
    %v1422 = vunpack.c.l.b16 %v1383
    %v1423 = vunpack.c.h.b16 %v1383
    %v1424 = vunpack.c.l.b16 %v1384
    %v1425 = vunpack.c.h.b16 %v1384
    %v1426 = vunpack.c.l.b16 %v1385
    %v1427 = vunpack.c.h.b16 %v1385
    %v1428 = vunpack.c.l.b16 %v1386
    %v1429 = vunpack.c.h.b16 %v1386
    %v1430 = vunpack.c.l.b16 %v1387
    %v1431 = vunpack.c.h.b16 %v1387
    %v1432 = vunpack.c.l.b16 %v1388
    %v1433 = vunpack.c.h.b16 %v1388
    %v1434 = vunpack.c.l.b16 %v1389
    %v1435 = vunpack.c.h.b16 %v1389
    %v1436 = vunpack.c.l.b16 %v1390
    %v1437 = vunpack.c.h.b16 %v1390
    %v1438 = vunpack.c.l.b16 %v1391
    %v1439 = vunpack.c.h.b16 %v1391
    %v1440 = vunpack.c.l.b16 %v1392
    %v1441 = vunpack.c.h.b16 %v1392
    %v1442 = vunpack.c.l.b16 %v1393
    %v1443 = vunpack.c.h.b16 %v1393
    %v1444 = vpack.c.b16 %v1422, %v1420
    %v1445 = vpack.c.b16 %v1423, %v1421
    %v1446 = vpack.c.b16 %v1426, %v1424
    %v1447 = vpack.c.b16 %v1427, %v1425
    %v1448 = vpack.c.b16 %v1430, %v1428
    %v1449 = vpack.c.b16 %v1431, %v1429
    %v1450 = vpack.c.b16 %v1434, %v1432
    %v1451 = vpack.c.b16 %v1435, %v1433
    %v1452 = vpack.c.b16 %v1438, %v1436
    %v1453 = vpack.c.b16 %v1439, %v1437
    %v1454 = vpack.c.b16 %v1442, %v1440
    %v1455 = vpack.c.b16 %v1443, %v1441
    %v1469 = vsel %vm593, %v1394, 0
    %v1472 = vsel %vm593, %v1395, 0
    %1474 = vmatprep.subr.bf16.mxu0 %v1445
    %1475 = vmatpush1.bf16.msra.mxu0 %v1444
    %1476 = vmatprep.subr.bf16.mxu0 %v1447
    %1477 = vmatpush1.bf16.msra.mxu0 %v1446
    %1478 = vmatprep.subr.bf16.mxu0 %v1449
    %1479 = vmatpush1.bf16.msra.mxu0 %v1448
    %1480 = vmatprep.subr.bf16.mxu0 %v1451
    %1481 = vmatpush1.bf16.msra.mxu0 %v1450
    %1482 = vmatprep.subr.bf16.mxu0 %v1453
    %1483 = vmatpush1.bf16.msra.mxu0 %v1452
    %1484 = vmatprep.subr.bf16.mxu0 %v1455
    %1485 = vmatpush1.bf16.msra.mxu0 %v1454
    %1486 = vmatprep.subr.bf16.mxu0 0
    %1487 = vmatpush1.bf16.msra.mxu0 0
    %1488 = vmatprep.subr.bf16.mxu0 0
    %1489 = vmatpush1.bf16.msra.mxu0 0
    %1490 = vmatprep.subr.bf16.mxu0 0
    %1491 = vmatpush1.bf16.msra.mxu0 0
    %1492 = vmatprep.subr.bf16.mxu0 0
    %1493 = vmatpush1.bf16.msra.mxu0 0
    %1494 = vmatprep.subr.bf16.mxu0 0
    %1495 = vmatpush1.bf16.msra.mxu0 0
    %1496 = vmatprep.subr.bf16.mxu0 0
    %1497 = vmatpush1.bf16.msra.mxu0 0
    %1498 = vmatprep.subr.bf16.mxu0 0
    %1499 = vmatpush1.bf16.msra.mxu0 0
    %1500 = vmatprep.subr.bf16.mxu0 0
    %1501 = vmatpush1.bf16.msra.mxu0 0
    %1502 = vmatprep.subr.bf16.mxu0 0
    %1503 = vmatpush1.bf16.msra.mxu0 0
    %1504 = vmatprep.subr.bf16.mxu0 0
    %1505 = vmatpush1.bf16.msra.mxu0 0
    %1506 = vmatprep.mubr.bf16.mxu0 0
    %1507 = vmatmul.mubr.bf16.gmra.mrb[0].mxu0 %v1469
    %v1508 = vpop.f32.mrb[0].mxu0
    %v1509 = vadd.f32 %v1401, %v1508
    %v1510 = vpop.f32.mrb[0].mxu0
    %v1511 = vadd.f32 %v1405, %v1510
    %v1512 = vpop.f32.mrb[0].mxu0
    %v1513 = vadd.f32 %v1401, %v1512
    %v1514 = vpop.f32.mrb[0].mxu0
    %v1515 = vadd.f32 %v1405, %v1514
    %1516 = vmatprep.mubr.bf16.mxu0 0
    %1517 = vmatmul.mubr.bf16.gmra.mrb[0].mxu0 %v1472
    %v1518 = vpop.f32.mrb[0].mxu0
    %v1519 = vadd.f32 %v1401, %v1518
    %v1520 = vpop.f32.mrb[0].mxu0
    %v1521 = vadd.f32 %v1405, %v1520
    %v1522 = vpop.f32.mrb[0].mxu0
    %v1523 = vadd.f32 %v1401, %v1522
    %v1524 = vpop.f32.mrb[0].mxu0
    %v1525 = vadd.f32 %v1405, %v1524
    %1526 = vdwg.mxu0
    %s1527 = scalar_lea.vmem [#allocation23], 1
    %v1528 = vld [vmem:[%s1527] ss:$2 sm:$0x3]
    %v1530 = vlaneseq
    %v1531 = vshrl.u32 %v1530, 7
    %v1532 = vsub.s32 0, %v1531
    %v1533 = vrot.slane %v1528, %v1532
    %v1534 = vlaneseq
    %v1535 = vshrl.u32 %v1534, 7
    %v1536 = vsub.s32 1, %v1535
    %v1537 = vrot.slane %v1528, %v1536
    %v1540 = vmul.f32 %v1273, %v1533
    %v1541 = vmul.f32 %v1273, %v1537
    %v1542 = vmul.f32 %v1276, %v1533
    %v1543 = vmul.f32 %v1276, %v1537
    %v1544 = vmul.f32 %v1279, %v1533
    %v1545 = vmul.f32 %v1279, %v1537
    %v1546 = vmul.f32 %v1282, %v1533
    %v1547 = vmul.f32 %v1282, %v1537
    %v1548 = vtanh.pop %v1540
    %v1549 = vtanh.pop %v1541
    %v1550 = vtanh.pop %v1542
    %v1551 = vtanh.pop %v1543
    %v1552 = vtanh.pop %v1544
    %v1553 = vtanh.pop %v1545
    %v1554 = vtanh.pop %v1546
    %v1555 = vtanh.pop %v1547
    %v1556 = vadd.f32 %v1548, 1.0
    %v1557 = vadd.f32 %v1549, 1.0
    %v1558 = vadd.f32 %v1550, 1.0
    %v1559 = vadd.f32 %v1551, 1.0
    %v1560 = vadd.f32 %v1552, 1.0
    %v1561 = vadd.f32 %v1553, 1.0
    %v1562 = vadd.f32 %v1554, 1.0
    %v1563 = vadd.f32 %v1555, 1.0
    %v1564 = vmul.f32 %v1509, %v1556
    %v1565 = vmul.f32 %v1511, %v1557
    %v1566 = vmul.f32 %v1513, %v1558
    %v1567 = vmul.f32 %v1515, %v1559
    %v1568 = vmul.f32 %v1519, %v1560
    %v1569 = vmul.f32 %v1521, %v1561
    %v1570 = vmul.f32 %v1523, %v1562
    %v1571 = vmul.f32 %v1525, %v1563
    %v1572 = vld [vmem:[#allocation14] sm:$0xf]
    %v1573 = vld [vmem:[#allocation14 + $0x4] sm:$0xf]
    %v1574 = vld [vmem:[#allocation14 + $0x8] sm:$0xf]
    %v1575 = vld [vmem:[#allocation14 + $0xc] sm:$0xf]
    %v1576 = vld [vmem:[#allocation14 + $0x10] sm:$0xf]
    %v1577 = vld [vmem:[#allocation14 + $0x14] sm:$0xf]
    %v1578 = vld [vmem:[#allocation14 + $0x18] sm:$0xf]
    %v1579 = vld [vmem:[#allocation14 + $0x1c] sm:$0xf]
    %v1580 = vld [vmem:[#allocation14 + $0x20] sm:$0xf]
    %v1581 = vld [vmem:[#allocation14 + $0x24] sm:$0xf]
    %v1582 = vld [vmem:[#allocation14 + $0x28] sm:$0xf]
    %v1583 = vld [vmem:[#allocation14 + $0x2c] sm:$0xf]
    %v1584 = vld [vmem:[#allocation14 + $0x30] sm:$0xf]
    %v1585 = vld [vmem:[#allocation14 + $0x34] sm:$0xf]
    %v1586 = vld [vmem:[#allocation14 + $0x38] sm:$0xf]
    %v1587 = vld [vmem:[#allocation14 + $0x3c] sm:$0xf]
    %v1588 = vld [vmem:[#allocation14 + $0x40] sm:$0xf]
    %v1589 = vld [vmem:[#allocation14 + $0x44] sm:$0xf]
    %v1590 = vld [vmem:[#allocation14 + $0x48] sm:$0xf]
    %v1591 = vld [vmem:[#allocation14 + $0x4c] sm:$0xf]
    %v1592 = vld [vmem:[#allocation14 + $0x50] sm:$0xf]
    %v1593 = vld [vmem:[#allocation14 + $0x54] sm:$0xf]
    %v1594 = vld [vmem:[#allocation14 + $0x58] sm:$0xf]
    %v1595 = vld [vmem:[#allocation14 + $0x5c] sm:$0xf]
    %v1596 = vpack.c.bf16 %v1566, %v1564
    %v1597 = vpack.c.bf16 %v1567, %v1565
    %v1598 = vpack.c.bf16 %v1570, %v1568
    %v1599 = vpack.c.bf16 %v1571, %v1569
    %v1600 = vld [vmem:[#allocation22 + $0x3] sm:$0x1]
    %v1601 = vlaneseq
    %v1602 = vshrl.u32 %v1601, 7
    %v1603 = vsub.s32 0, %v1602
    %v1604 = vrot.slane %v1600, %v1603
    %v1629 = vunpack.c.l.b16 %v1572
    %v1630 = vunpack.c.l.b16 %v1573
    %v1631 = vunpack.c.l.b16 %v1574
    %v1632 = vunpack.c.l.b16 %v1575
    %v1633 = vunpack.c.l.b16 %v1576
    %v1634 = vunpack.c.l.b16 %v1577
    %v1635 = vunpack.c.l.b16 %v1578
    %v1636 = vunpack.c.l.b16 %v1579
    %v1637 = vunpack.c.l.b16 %v1580
    %v1638 = vunpack.c.l.b16 %v1581
    %v1639 = vunpack.c.l.b16 %v1582
    %v1640 = vunpack.c.l.b16 %v1583
    %v1641 = vunpack.c.l.b16 %v1584
    %v1642 = vunpack.c.l.b16 %v1585
    %v1643 = vunpack.c.l.b16 %v1586
    %v1644 = vunpack.c.l.b16 %v1587
    %v1645 = vunpack.c.l.b16 %v1588
    %v1646 = vunpack.c.l.b16 %v1589
    %v1647 = vunpack.c.l.b16 %v1590
    %v1648 = vunpack.c.l.b16 %v1591
    %v1649 = vunpack.c.l.b16 %v1592
    %v1650 = vunpack.c.l.b16 %v1593
    %v1651 = vunpack.c.l.b16 %v1594
    %v1652 = vunpack.c.l.b16 %v1595
    %v1653 = vpack.c.b16 %v1630, %v1629
    %v1654 = vpack.c.b16 %v1632, %v1631
    %v1655 = vpack.c.b16 %v1634, %v1633
    %v1656 = vpack.c.b16 %v1636, %v1635
    %v1657 = vpack.c.b16 %v1638, %v1637
    %v1658 = vpack.c.b16 %v1640, %v1639
    %v1659 = vpack.c.b16 %v1642, %v1641
    %v1660 = vpack.c.b16 %v1644, %v1643
    %v1661 = vpack.c.b16 %v1646, %v1645
    %v1662 = vpack.c.b16 %v1648, %v1647
    %v1663 = vpack.c.b16 %v1650, %v1649
    %v1664 = vpack.c.b16 %v1652, %v1651
    %v1678 = vsel %vm384, %v1597, 0
    %v1681 = vsel %vm384, %v1599, 0
    %1683 = vmatprep.subr.bf16.mxu0 0
    %1684 = vmatpush1.bf16.msra.mxu0 %v1653
    %1685 = vmatprep.subr.bf16.mxu0 0
    %1686 = vmatpush1.bf16.msra.mxu0 %v1654
    %1687 = vmatprep.subr.bf16.mxu0 0
    %1688 = vmatpush1.bf16.msra.mxu0 %v1655
    %1689 = vmatprep.subr.bf16.mxu0 0
    %1690 = vmatpush1.bf16.msra.mxu0 %v1656
    %1691 = vmatprep.subr.bf16.mxu0 0
    %1692 = vmatpush1.bf16.msra.mxu0 %v1657
    %1693 = vmatprep.subr.bf16.mxu0 0
    %1694 = vmatpush1.bf16.msra.mxu0 %v1658
    %1695 = vmatprep.subr.bf16.mxu0 0
    %1696 = vmatpush1.bf16.msra.mxu0 %v1659
    %1697 = vmatprep.subr.bf16.mxu0 0
    %1698 = vmatpush1.bf16.msra.mxu0 %v1660
    %1699 = vmatprep.subr.bf16.mxu0 0
    %1700 = vmatpush1.bf16.msra.mxu0 %v1661
    %1701 = vmatprep.subr.bf16.mxu0 0
    %1702 = vmatpush1.bf16.msra.mxu0 %v1662
    %1703 = vmatprep.subr.bf16.mxu0 0
    %1704 = vmatpush1.bf16.msra.mxu0 %v1663
    %1705 = vmatprep.subr.bf16.mxu0 0
    %1706 = vmatpush1.bf16.msra.mxu0 %v1664
    %1707 = vmatprep.subr.bf16.mxu0 0
    %1708 = vmatpush1.bf16.msra.mxu0 0
    %1709 = vmatprep.subr.bf16.mxu0 0
    %1710 = vmatpush1.bf16.msra.mxu0 0
    %1711 = vmatprep.subr.bf16.mxu0 0
    %1712 = vmatpush1.bf16.msra.mxu0 0
    %1713 = vmatprep.subr.bf16.mxu0 0
    %1714 = vmatpush1.bf16.msra.mxu0 0
    %1715 = vmatprep.mubr.bf16.mxu0 %v1678
    %1716 = vmatmul.mubr.bf16.gmra.mrb[0].mxu0 %v1596
    %v1717 = vpop.f32.mrb[0].mxu0
    %v1718 = vadd.f32 %v1604, %v1717
    %v1719 = vpop.f32.mrb[0].mxu0
    %v1720 = vpop.f32.mrb[0].mxu0
    %v1721 = vadd.f32 %v1604, %v1720
    %v1722 = vpop.f32.mrb[0].mxu0
    %1723 = vmatprep.mubr.bf16.mxu0 %v1681
    %1724 = vmatmul.mubr.bf16.gmra.mrb[0].mxu0 %v1598
    %v1725 = vpop.f32.mrb[0].mxu0
    %v1726 = vadd.f32 %v1604, %v1725
    %v1727 = vpop.f32.mrb[0].mxu0
    %v1728 = vpop.f32.mrb[0].mxu0
    %v1729 = vadd.f32 %v1604, %v1728
    %v1730 = vpop.f32.mrb[0].mxu0
    %1731 = vdwg.mxu0
    %v1732 = vmax.f32 %v1718, 0.0
    %v1733 = vmax.f32 %v1721, 0.0
    %v1734 = vmax.f32 %v1726, 0.0
    %v1735 = vmax.f32 %v1729, 0.0
    %s1736 = scalar_lea.vmem [#allocation16], 32
    %v1737 = vld [vmem:[%s1736] sm:$0xf]
    %v1738 = vld [vmem:[%s1736 + $0x4] sm:$0xf]
    %v1739 = vld [vmem:[%s1736 + $0x8] sm:$0xf]
    %v1740 = vld [vmem:[%s1736 + $0xc] sm:$0xf]
    %v1741 = vld [vmem:[%s1736 + $0x10] sm:$0xf]
    %v1742 = vld [vmem:[%s1736 + $0x14] sm:$0xf]
    %v1743 = vld [vmem:[%s1736 + $0x18] sm:$0xf]
    %v1744 = vld [vmem:[%s1736 + $0x1c] sm:$0xf]
    %v1745 = vpack.c.bf16 %v1733, %v1732
    %v1746 = vpack.c.bf16 %v1735, %v1734
    %v1747 = vld [vmem:[#allocation25 + $0x1] sm:$0x1]
    %v1748 = vlaneseq
    %v1749 = vshrl.u32 %v1748, 7
    %v1750 = vsub.s32 0, %v1749
    %v1751 = vrot.slane %v1747, %v1750
    %v1760 = vunpack.c.l.b16 %v1737
    %v1761 = vunpack.c.l.b16 %v1738
    %v1762 = vunpack.c.l.b16 %v1739
    %v1763 = vunpack.c.l.b16 %v1740
    %v1764 = vunpack.c.l.b16 %v1741
    %v1765 = vunpack.c.l.b16 %v1742
    %v1766 = vunpack.c.l.b16 %v1743
    %v1767 = vunpack.c.l.b16 %v1744
    %v1768 = vpack.c.b16 %v1761, %v1760
    %v1769 = vpack.c.b16 %v1763, %v1762
    %v1770 = vpack.c.b16 %v1765, %v1764
    %v1771 = vpack.c.b16 %v1767, %v1766
    %v1777 = vsel %vm384, %v1745, 0
    %v1780 = vsel %vm384, %v1746, 0
    %1782 = vmatprep.subr.bf16.mxu0 0
    %1783 = vmatpush1.bf16.msra.mxu0 %v1768
    %1784 = vmatprep.subr.bf16.mxu0 0
    %1785 = vmatpush1.bf16.msra.mxu0 %v1769
    %1786 = vmatprep.subr.bf16.mxu0 0
    %1787 = vmatpush1.bf16.msra.mxu0 %v1770
    %1788 = vmatprep.subr.bf16.mxu0 0
    %1789 = vmatpush1.bf16.msra.mxu0 %v1771
    %1790 = vmatprep.subr.bf16.mxu0 0
    %1791 = vmatpush1.bf16.msra.mxu0 0
    %1792 = vmatprep.subr.bf16.mxu0 0
    %1793 = vmatpush1.bf16.msra.mxu0 0
    %1794 = vmatprep.subr.bf16.mxu0 0
    %1795 = vmatpush1.bf16.msra.mxu0 0
    %1796 = vmatprep.subr.bf16.mxu0 0
    %1797 = vmatpush1.bf16.msra.mxu0 0
    %1798 = vmatprep.subr.bf16.mxu0 0
    %1799 = vmatpush1.bf16.msra.mxu0 0
    %1800 = vmatprep.subr.bf16.mxu0 0
    %1801 = vmatpush1.bf16.msra.mxu0 0
    %1802 = vmatprep.subr.bf16.mxu0 0
    %1803 = vmatpush1.bf16.msra.mxu0 0
    %1804 = vmatprep.subr.bf16.mxu0 0
    %1805 = vmatpush1.bf16.msra.mxu0 0
    %1806 = vmatprep.subr.bf16.mxu0 0
    %1807 = vmatpush1.bf16.msra.mxu0 0
    %1808 = vmatprep.subr.bf16.mxu0 0
    %1809 = vmatpush1.bf16.msra.mxu0 0
    %1810 = vmatprep.subr.bf16.mxu0 0
    %1811 = vmatpush1.bf16.msra.mxu0 0
    %1812 = vmatprep.subr.bf16.mxu0 0
    %1813 = vmatpush1.bf16.msra.mxu0 0
    %1814 = vmatprep.mubr.bf16.mxu0 0
    %1815 = vmatmul.mubr.bf16.gmra.mrb[0].mxu0 %v1777
    %v1816 = vpop.f32.mrb[0].mxu0
    %v1817 = vadd.f32 %v1751, %v1816
    %v1818 = vpop.f32.mrb[0].mxu0
    %v1819 = vpop.f32.mrb[0].mxu0
    %v1820 = vadd.f32 %v1751, %v1819
    %v1821 = vpop.f32.mrb[0].mxu0
    %1822 = vmatprep.mubr.bf16.mxu0 0
    %1823 = vmatmul.mubr.bf16.gmra.mrb[0].mxu0 %v1780
    %v1824 = vpop.f32.mrb[0].mxu0
    %v1825 = vadd.f32 %v1751, %v1824
    %v1826 = vpop.f32.mrb[0].mxu0
    %v1827 = vpop.f32.mrb[0].mxu0
    %v1828 = vadd.f32 %v1751, %v1827
    %v1829 = vpop.f32.mrb[0].mxu0
    %1830 = vdwg.mxu0
    %v1831 = vsel %vm1270, %v1817, -inf
    %1832 = vmax.xlane.f32.xlu0 %v1831
    %v1833 = vpop.xlane.xlu0 %1832
    %v1834 = vsel %vm1270, %v1820, -inf
    %1835 = vmax.xlane.f32.xlu0 %v1834
    %v1836 = vpop.xlane.xlu0 %1835
    %v1837 = vsel %vm1270, %v1825, -inf
    %1838 = vmax.xlane.f32.xlu0 %v1837
    %v1839 = vpop.xlane.xlu0 %1838
    %v1840 = vsel %vm1270, %v1828, -inf
    %1841 = vmax.xlane.f32.xlu0 %v1840
    %v1842 = vpop.xlane.xlu0 %1841
    %v1843 = vsub.f32 %v1817, %v1833
    %v1844 = vsub.f32 %v1820, %v1836
    %v1845 = vsub.f32 %v1825, %v1839
    %v1846 = vsub.f32 %v1828, %v1842
    %v1847 = vmul.f32 %v1843, 1.442695
    %v1848 = vpow.pop %v1847
    %v1849 = vmul.f32 %v1844, 1.442695
    %v1850 = vpow.pop %v1849
    %v1851 = vmul.f32 %v1845, 1.442695
    %v1852 = vpow.pop %v1851
    %v1853 = vmul.f32 %v1846, 1.442695
    %v1854 = vpow.pop %v1853
    %v1855 = vsel %vm1270, %v1848, 0.0
    %1856 = vadd.xlane.f32.xlu0 %v1855
    %v1857 = vpop.xlane.xlu0 %1856
    %v1858 = vsel %vm1270, %v1850, 0.0
    %1859 = vadd.xlane.f32.xlu0 %v1858
    %v1860 = vpop.xlane.xlu0 %1859
    %v1861 = vsel %vm1270, %v1852, 0.0
    %1862 = vadd.xlane.f32.xlu0 %v1861
    %v1863 = vpop.xlane.xlu0 %1862
    %v1864 = vsel %vm1270, %v1854, 0.0
    %1865 = vadd.xlane.f32.xlu0 %v1864
    %v1866 = vpop.xlane.xlu0 %1865
    %v1867 = vrcp.pop %v1857
    %v1868 = vrcp.pop %v1860
    %v1869 = vrcp.pop %v1863
    %v1870 = vrcp.pop %v1866
    %v1871 = vmul.f32 %v1848, %v1867
    %v1872 = vmul.f32 %v1850, %v1868
    %v1873 = vmul.f32 %v1852, %v1869
    %v1874 = vmul.f32 %v1854, %v1870
    %1876 = vset.pattern.permute.xlu0 0
    %1877 = vperm.xlu0 %1876, %v1871
    %v1878 = vpop.permute.xlu0 %1877
    %1881 = vset.pattern.permute.xlu0 0
    %1882 = vperm.xlu0 %1881, %v1872
    %v1883 = vpop.permute.xlu0 %1882
    %1886 = vset.pattern.permute.xlu0 0
    %1887 = vperm.xlu0 %1886, %v1873
    %v1888 = vpop.permute.xlu0 %1887
    %1891 = vset.pattern.permute.xlu0 0
    %1892 = vperm.xlu0 %1891, %v1874
    %v1893 = vpop.permute.xlu0 %1892
    %v1895 = vmul.f32 %v1564, %v1878
    %v1896 = vmul.f32 %v1566, %v1883
    %v1897 = vmul.f32 %v1568, %v1888
    %v1898 = vmul.f32 %v1570, %v1893
    %1899 = vset.pattern.permute.xlu0 1
    %1900 = vperm.xlu0 %1899, %v1871
    %v1901 = vpop.permute.xlu0 %1900
    %1903 = vset.pattern.permute.xlu0 1
    %1904 = vperm.xlu0 %1903, %v1872
    %v1905 = vpop.permute.xlu0 %1904
    %1907 = vset.pattern.permute.xlu0 1
    %1908 = vperm.xlu0 %1907, %v1873
    %v1909 = vpop.permute.xlu0 %1908
    %1911 = vset.pattern.permute.xlu0 1
    %1912 = vperm.xlu0 %1911, %v1874
    %v1913 = vpop.permute.xlu0 %1912
    %v1915 = vmul.f32 %v1564, %v1901
    %v1916 = vmul.f32 %v1566, %v1905
    %v1917 = vmul.f32 %v1568, %v1909
    %v1918 = vmul.f32 %v1570, %v1913
    %1923 = vrot.lane.b32.xlu0 %v1915, 64
    %v1924 = vpop.permute.xlu0 %1923
    %1925 = vrot.lane.b32.xlu0 %v1916, 64
    %v1926 = vpop.permute.xlu0 %1925
    %1927 = vrot.lane.b32.xlu0 %v1917, 64
    %v1928 = vpop.permute.xlu0 %1927
    %1929 = vrot.lane.b32.xlu0 %v1918, 64
    %v1930 = vpop.permute.xlu0 %1929
    %v1935 = vadd.f32 %v1895, %v1924
    %v1936 = vadd.f32 %v1896, %v1926
    %v1937 = vadd.f32 %v1897, %v1928
    %v1938 = vadd.f32 %v1898, %v1930
    %1939 = vset.pattern.permute.xlu0 2
    %1940 = vperm.xlu0 %1939, %v1871
    %v1941 = vpop.permute.xlu0 %1940
    %1943 = vset.pattern.permute.xlu0 2
    %1944 = vperm.xlu0 %1943, %v1872
    %v1945 = vpop.permute.xlu0 %1944
    %1947 = vset.pattern.permute.xlu0 2
    %1948 = vperm.xlu0 %1947, %v1873
    %v1949 = vpop.permute.xlu0 %1948
    %1951 = vset.pattern.permute.xlu0 2
    %1952 = vperm.xlu0 %1951, %v1874
    %v1953 = vpop.permute.xlu0 %1952
    %v1955 = vmul.f32 %v1565, %v1941
    %v1956 = vmul.f32 %v1567, %v1945
    %v1957 = vmul.f32 %v1569, %v1949
    %v1958 = vmul.f32 %v1571, %v1953
    %v1959 = vadd.f32 %v1935, %v1955
    %v1960 = vadd.f32 %v1936, %v1956
    %v1961 = vadd.f32 %v1937, %v1957
    %v1962 = vadd.f32 %v1938, %v1958
    %v1963 = vld [vmem:[#allocation16] sm:$0xf]
    %v1964 = vld [vmem:[#allocation16 + $0x4] sm:$0xf]
    %v1965 = vld [vmem:[#allocation16 + $0x8] sm:$0xf]
    %v1966 = vld [vmem:[#allocation16 + $0xc] sm:$0xf]
    %v1967 = vld [vmem:[#allocation16 + $0x10] sm:$0xf]
    %v1968 = vld [vmem:[#allocation16 + $0x14] sm:$0xf]
    %v1969 = vld [vmem:[#allocation16 + $0x18] sm:$0xf]
    %v1970 = vld [vmem:[#allocation16 + $0x1c] sm:$0xf]
    %v1971 = vpack.c.bf16 %v1960, %v1959
    %v1972 = vpack.c.bf16 %v1962, %v1961
    %v1973 = vld [vmem:[#allocation25] sm:$0x1]
    %v1974 = vlaneseq
    %v1975 = vshrl.u32 %v1974, 7
    %v1976 = vsub.s32 0, %v1975
    %v1977 = vrot.slane %v1973, %v1976
    %v1986 = vunpack.c.l.b16 %v1963
    %v1987 = vunpack.c.l.b16 %v1964
    %v1988 = vunpack.c.l.b16 %v1965
    %v1989 = vunpack.c.l.b16 %v1966
    %v1990 = vunpack.c.l.b16 %v1967
    %v1991 = vunpack.c.l.b16 %v1968
    %v1992 = vunpack.c.l.b16 %v1969
    %v1993 = vunpack.c.l.b16 %v1970
    %v1994 = vpack.c.b16 %v1987, %v1986
    %v1995 = vpack.c.b16 %v1989, %v1988
    %v1996 = vpack.c.b16 %v1991, %v1990
    %v1997 = vpack.c.b16 %v1993, %v1992
    %v2003 = vsel %vm384, %v1971, 0
    %v2006 = vsel %vm384, %v1972, 0
    %2008 = vmatprep.subr.bf16.mxu0 0
    %2009 = vmatpush1.bf16.msra.mxu0 %v1994
    %2010 = vmatprep.subr.bf16.mxu0 0
    %2011 = vmatpush1.bf16.msra.mxu0 %v1995
    %2012 = vmatprep.subr.bf16.mxu0 0
    %2013 = vmatpush1.bf16.msra.mxu0 %v1996
    %2014 = vmatprep.subr.bf16.mxu0 0
    %2015 = vmatpush1.bf16.msra.mxu0 %v1997
    %2016 = vmatprep.subr.bf16.mxu0 0
    %2017 = vmatpush1.bf16.msra.mxu0 0
    %2018 = vmatprep.subr.bf16.mxu0 0
    %2019 = vmatpush1.bf16.msra.mxu0 0
    %2020 = vmatprep.subr.bf16.mxu0 0
    %2021 = vmatpush1.bf16.msra.mxu0 0
    %2022 = vmatprep.subr.bf16.mxu0 0
    %2023 = vmatpush1.bf16.msra.mxu0 0
    %2024 = vmatprep.subr.bf16.mxu0 0
    %2025 = vmatpush1.bf16.msra.mxu0 0
    %2026 = vmatprep.subr.bf16.mxu0 0
    %2027 = vmatpush1.bf16.msra.mxu0 0
    %2028 = vmatprep.subr.bf16.mxu0 0
    %2029 = vmatpush1.bf16.msra.mxu0 0
    %2030 = vmatprep.subr.bf16.mxu0 0
    %2031 = vmatpush1.bf16.msra.mxu0 0
    %2032 = vmatprep.subr.bf16.mxu0 0
    %2033 = vmatpush1.bf16.msra.mxu0 0
    %2034 = vmatprep.subr.bf16.mxu0 0
    %2035 = vmatpush1.bf16.msra.mxu0 0
    %2036 = vmatprep.subr.bf16.mxu0 0
    %2037 = vmatpush1.bf16.msra.mxu0 0
    %2038 = vmatprep.subr.bf16.mxu0 0
    %2039 = vmatpush1.bf16.msra.mxu0 0
    %2040 = vmatprep.mubr.bf16.mxu0 0
    %2041 = vmatmul.mubr.bf16.gmra.mrb[0].mxu0 %v2003
    %v2042 = vpop.f32.mrb[0].mxu0
    %v2043 = vadd.f32 %v1977, %v2042
    %v2044 = vpop.f32.mrb[0].mxu0
    %v2045 = vpop.f32.mrb[0].mxu0
    %v2046 = vadd.f32 %v1977, %v2045
    %v2047 = vpop.f32.mrb[0].mxu0
    %2048 = vmatprep.mubr.bf16.mxu0 0
    %2049 = vmatmul.mubr.bf16.gmra.mrb[0].mxu0 %v2006
    %v2050 = vpop.f32.mrb[0].mxu0
    %v2051 = vadd.f32 %v1977, %v2050
    %v2052 = vpop.f32.mrb[0].mxu0
    %v2053 = vpop.f32.mrb[0].mxu0
    %v2054 = vadd.f32 %v1977, %v2053
    %v2055 = vpop.f32.mrb[0].mxu0
    %2056 = vdwg.mxu0
    %v2057 = vmax.f32 %v2043, 0.0
    %v2058 = vmax.f32 %v2046, 0.0
    %v2059 = vmax.f32 %v2051, 0.0
    %v2060 = vmax.f32 %v2054, 0.0
    %v2061 = vld [vmem:[#allocation17] sm:$0xf]
    %v2062 = vld [vmem:[#allocation17 + $0x4] sm:$0xf]
    %v2063 = vld [vmem:[#allocation17 + $0x8] sm:$0xf]
    %v2064 = vld [vmem:[#allocation17 + $0xc] sm:$0xf]
    %v2065 = vpack.c.bf16 %v2058, %v2057
    %v2066 = vpack.c.bf16 %v2060, %v2059
    %v2067 = vld [vmem:[#allocation22 + $0x4] sm:$0x1]
    %v2068 = vlaneseq
    %v2069 = vshrl.u32 %v2068, 7
    %v2070 = vsub.s32 0, %v2069
    %v2071 = vrot.slane %v2067, %v2070
    %v2076 = vunpack.c.l.b16 %v2061
    %v2077 = vunpack.c.l.b16 %v2062
    %v2078 = vunpack.c.l.b16 %v2063
    %v2079 = vunpack.c.l.b16 %v2064
    %v2080 = vpack.c.b16 %v2077, %v2076
    %v2081 = vpack.c.b16 %v2079, %v2078
    %vm2084 = vcmask 261120
    %v2086 = vsel %vm2084, %v2065, 0
    %v2089 = vsel %vm2084, %v2066, 0
    %2091 = vmatprep.subr.bf16.mxu0 0
    %2092 = vmatpush1.bf16.msra.mxu0 %v2080
    %2093 = vmatprep.subr.bf16.mxu0 0
    %2094 = vmatpush1.bf16.msra.mxu0 %v2081
    %2095 = vmatprep.subr.bf16.mxu0 0
    %2096 = vmatpush1.bf16.msra.mxu0 0
    %2097 = vmatprep.subr.bf16.mxu0 0
    %2098 = vmatpush1.bf16.msra.mxu0 0
    %2099 = vmatprep.subr.bf16.mxu0 0
    %2100 = vmatpush1.bf16.msra.mxu0 0
    %2101 = vmatprep.subr.bf16.mxu0 0
    %2102 = vmatpush1.bf16.msra.mxu0 0
    %2103 = vmatprep.subr.bf16.mxu0 0
    %2104 = vmatpush1.bf16.msra.mxu0 0
    %2105 = vmatprep.subr.bf16.mxu0 0
    %2106 = vmatpush1.bf16.msra.mxu0 0
    %2107 = vmatprep.subr.bf16.mxu0 0
    %2108 = vmatpush1.bf16.msra.mxu0 0
    %2109 = vmatprep.subr.bf16.mxu0 0
    %2110 = vmatpush1.bf16.msra.mxu0 0
    %2111 = vmatprep.subr.bf16.mxu0 0
    %2112 = vmatpush1.bf16.msra.mxu0 0
    %2113 = vmatprep.subr.bf16.mxu0 0
    %2114 = vmatpush1.bf16.msra.mxu0 0
    %2115 = vmatprep.subr.bf16.mxu0 0
    %2116 = vmatpush1.bf16.msra.mxu0 0
    %2117 = vmatprep.subr.bf16.mxu0 0
    %2118 = vmatpush1.bf16.msra.mxu0 0
    %2119 = vmatprep.subr.bf16.mxu0 0
    %2120 = vmatpush1.bf16.msra.mxu0 0
    %2121 = vmatprep.subr.bf16.mxu0 0
    %2122 = vmatpush1.bf16.msra.mxu0 0
    %2123 = vmatprep.mubr.bf16.mxu0 0
    %2124 = vmatmul.mubr.bf16.gmra.mrb[0].mxu0 %v2086
    %v2125 = vpop.f32.mrb[0].mxu0
    %v2126 = vadd.f32 %v2071, %v2125
    %v2127 = vpop.f32.mrb[0].mxu0
    %v2128 = vpop.f32.mrb[0].mxu0
    %v2129 = vadd.f32 %v2071, %v2128
    %v2130 = vpop.f32.mrb[0].mxu0
    %2131 = vmatprep.mubr.bf16.mxu0 0
    %2132 = vmatmul.mubr.bf16.gmra.mrb[0].mxu0 %v2089
    %v2133 = vpop.f32.mrb[0].mxu0
    %v2134 = vadd.f32 %v2071, %v2133
    %v2135 = vpop.f32.mrb[0].mxu0
    %v2136 = vpop.f32.mrb[0].mxu0
    %v2137 = vadd.f32 %v2071, %v2136
    %v2138 = vpop.f32.mrb[0].mxu0
    %2139 = vdwg.mxu0
    %v2140 = vadd.f32 %v2126, %v1266
    %v2141 = vadd.f32 %v2129, %v1267
    %v2142 = vadd.f32 %v2134, %v1268
    %v2143 = vadd.f32 %v2137, %v1269
    %s2144 = scalar_lea.vmem [#allocation13], 96
    %v2145 = vld [vmem:[%s2144] sm:$0xf]
    %v2146 = vld [vmem:[%s2144 + $0x4] sm:$0xf]
    %v2147 = vld [vmem:[%s2144 + $0x8] sm:$0xf]
    %v2148 = vld [vmem:[%s2144 + $0xc] sm:$0xf]
    %v2149 = vld [vmem:[%s2144 + $0x10] sm:$0xf]
    %v2150 = vld [vmem:[%s2144 + $0x14] sm:$0xf]
    %v2151 = vld [vmem:[%s2144 + $0x18] sm:$0xf]
    %v2152 = vld [vmem:[%s2144 + $0x1c] sm:$0xf]
    %v2153 = vpack.c.bf16 %v2141, %v2140
    %v2154 = vpack.c.bf16 %v2143, %v2142
    %v2163 = vunpack.c.l.b16 %v2145
    %v2164 = vunpack.c.l.b16 %v2146
    %v2165 = vunpack.c.l.b16 %v2147
    %v2166 = vunpack.c.l.b16 %v2148
    %v2167 = vunpack.c.l.b16 %v2149
    %v2168 = vunpack.c.l.b16 %v2150
    %v2169 = vunpack.c.l.b16 %v2151
    %v2170 = vunpack.c.l.b16 %v2152
    %v2171 = vpack.c.b16 %v2164, %v2163
    %v2172 = vpack.c.b16 %v2166, %v2165
    %v2173 = vpack.c.b16 %v2168, %v2167
    %v2174 = vpack.c.b16 %v2170, %v2169
    %2183 = vrot.lane.b32.xlu0 %v849, 64
    %v2184 = vpop.permute.xlu0 %2183
    %2185 = vrot.lane.b32.xlu0 %v852, 64
    %v2186 = vpop.permute.xlu0 %2185
    %2187 = vrot.lane.b32.xlu0 %v857, 64
    %v2188 = vpop.permute.xlu0 %2187
    %2189 = vrot.lane.b32.xlu0 %v860, 64
    %v2190 = vpop.permute.xlu0 %2189
    %v2196 = vsel %vm384, %v2153, 0
    %v2199 = vsel %vm384, %v2154, 0
    %2201 = vmatprep.subr.bf16.mxu0 0
    %2202 = vmatpush1.bf16.msra.mxu0 %v2171
    %2203 = vmatprep.subr.bf16.mxu0 0
    %2204 = vmatpush1.bf16.msra.mxu0 %v2172
    %2205 = vmatprep.subr.bf16.mxu0 0
    %2206 = vmatpush1.bf16.msra.mxu0 %v2173
    %2207 = vmatprep.subr.bf16.mxu0 0
    %2208 = vmatpush1.bf16.msra.mxu0 %v2174
    %2209 = vmatprep.subr.bf16.mxu0 0
    %2210 = vmatpush1.bf16.msra.mxu0 0
    %2211 = vmatprep.subr.bf16.mxu0 0
    %2212 = vmatpush1.bf16.msra.mxu0 0
    %2213 = vmatprep.subr.bf16.mxu0 0
    %2214 = vmatpush1.bf16.msra.mxu0 0
    %2215 = vmatprep.subr.bf16.mxu0 0
    %2216 = vmatpush1.bf16.msra.mxu0 0
    %2217 = vmatprep.subr.bf16.mxu0 0
    %2218 = vmatpush1.bf16.msra.mxu0 0
    %2219 = vmatprep.subr.bf16.mxu0 0
    %2220 = vmatpush1.bf16.msra.mxu0 0
    %2221 = vmatprep.subr.bf16.mxu0 0
    %2222 = vmatpush1.bf16.msra.mxu0 0
    %2223 = vmatprep.subr.bf16.mxu0 0
    %2224 = vmatpush1.bf16.msra.mxu0 0
    %2225 = vmatprep.subr.bf16.mxu0 0
    %2226 = vmatpush1.bf16.msra.mxu0 0
    %2227 = vmatprep.subr.bf16.mxu0 0
    %2228 = vmatpush1.bf16.msra.mxu0 0
    %2229 = vmatprep.subr.bf16.mxu0 0
    %2230 = vmatpush1.bf16.msra.mxu0 0
    %2231 = vmatprep.subr.bf16.mxu0 0
    %2232 = vmatpush1.bf16.msra.mxu0 0
    %2233 = vmatprep.mubr.bf16.mxu0 0
    %2234 = vmatmul.mubr.bf16.gmra.mrb[0].mxu0 %v2196
    %v2235 = vpop.f32.mrb[0].mxu0
    %v2236 = vadd.f32 %v2184, %v2235
    %v2237 = vpop.f32.mrb[0].mxu0
    %v2238 = vpop.f32.mrb[0].mxu0
    %v2239 = vadd.f32 %v2186, %v2238
    %v2240 = vpop.f32.mrb[0].mxu0
    %2241 = vmatprep.mubr.bf16.mxu0 0
    %2242 = vmatmul.mubr.bf16.gmra.mrb[0].mxu0 %v2199
    %v2243 = vpop.f32.mrb[0].mxu0
    %v2244 = vadd.f32 %v2188, %v2243
    %v2245 = vpop.f32.mrb[0].mxu0
    %v2246 = vpop.f32.mrb[0].mxu0
    %v2247 = vadd.f32 %v2190, %v2246
    %v2248 = vpop.f32.mrb[0].mxu0
    %2249 = vdwg.mxu0
    %v2250 = vmax.f32 %v2236, 0.0
    %v2251 = vmax.f32 %v2239, 0.0
    %v2252 = vmax.f32 %v2244, 0.0
    %v2253 = vmax.f32 %v2247, 0.0
    %2254 = vst.msk [vmem:[#allocation26] sm:$0xff] %vm384, %v2250
    %2255 = vst.msk [vmem:[#allocation26 + $0x8] sm:$0xff] %vm384, %v2251
    %2256 = vst.msk [vmem:[#allocation26 + $0x10] sm:$0xff] %vm384, %v2252
    %2257 = vst.msk [vmem:[#allocation26 + $0x18] sm:$0xff] %vm384, %v2253
    // Predicated region
    $region122: #{tpu_custom_call.1} parent=1 // pred_check
      _
    $region123: #{tpu_custom_call.1} parent=1 // pred_check_branch
      %2259 = sbr.rel (0) target = $region125
    $region124: #{tpu_custom_call.1} parent=1 // pred_region
      %s2261 = ssub.s32 512, 512
      %2262 = vsyncadd [#allocation4], %s2261
      %s2263 = sshll.u32 [#allocation26], 4
      %s2264 = int_to_ptr.vmem [resolvable:$true] %s2263
      %2269 = dma.vmem_to_hbm [thread:$0]  %s2264, 512, %s15, [#allocation4], 128, 128, 8
    $region125: #{tpu_custom_call.1} parent=1 // pred_fallthru
      _
    // Predicated region
    $region126: #{tpu_custom_call.1} parent=1 // pred_check
      _
    $region127: #{tpu_custom_call.1} parent=1 // pred_check_branch
      %2271 = sbr.rel (0) target = $region129
    $region128: #{tpu_custom_call.1} parent=1 // pred_region
      %2272 = dma.done [#allocation4], 512
    $region129: #{tpu_custom_call.1} parent=1 // pred_fallthru
      _
    %2273 = vsyncpa [#allocation3], 1
    %2274 = vsyncpa [#allocation6], 1
    %2275 = vsyncpa [#allocation9], 1
    %2276 = vsyncpa [#allocation12], 1
    %2277 = vsyncpa [#allocation15], 1
    %2278 = vsyncpa [#allocation18], 1
    %2279 = vsyncpa [#allocation21], 1
    %2280 = vsyncpa [#allocation24], 1
    %2281 = vsyncpa [#allocation4], 1

</llo_original>
